<compile_context>
chip_gen: v7x
topology: tpu7x:2x2x1
jax: 0.10.0
libtpu: 0.0.40
codegen_flags: <defaults>
</compile_context>

<pallas_src>
import jax
import jax.numpy as jnp
import numpy as np
from jax import lax
from jax.experimental import pallas as pl
from jax.experimental.pallas import tpu as pltpu

BN_EPS = 1e-5


def _decoder_block_kernel(x_ref, wr_ref, br_ref, wc0_ref, wc1_ref, wc2_ref,
                          bc_ref, g_ref, b_ref, wu0_ref, wu1_ref, bu_ref,
                          o_ref):
    """Whole DecoderBlock forward for the full batch, resident in VMEM.

    x_ref : (N, Cin_tot, L)   o_ref : (N, Cout, 2L)    (channels-first)
    """
    N, _, L = x_ref.shape
    Cout = o_ref.shape[1]
    L2 = 2 * L

    wr = wr_ref[...]                        # (Cin, Cin_tot)
    br = br_ref[...]                        # (Cin, 1)
    wc0 = wc0_ref[...]                      # (Cout, Cin)  tap t-1
    wc1 = wc1_ref[...]                      # (Cout, Cin)  tap t
    wc2 = wc2_ref[...]                      # (Cout, Cin)  tap t+1
    bc = bc_ref[...]                        # (Cout, 1)

    Cin = wr.shape[0]
    lane = lax.broadcasted_iota(jnp.int32, (Cin, L), 1)

    # ---- conv stack per batch element (all stays in registers/VMEM) -------
    ys = []
    total = jnp.zeros((Cout, 1), jnp.float32)
    for n in range(N):
        x = x_ref[n]                                            # (Cin_tot, L)
        # 1x1 conv == channel matmul, then ReLU.
        h = jnp.dot(wr, x, preferred_element_type=jnp.float32) + br
        h = jnp.maximum(h, 0.0)                                 # (Cin, L)
        # k=3, padding=1 taps via lane rolls (non-negative shifts) + masks.
        h_m1 = jnp.where(lane == 0, 0.0, pltpu.roll(h, 1, axis=1))          # h[:, t-1]
        h_p1 = jnp.where(lane == L - 1, 0.0, pltpu.roll(h, L - 1, axis=1))  # h[:, t+1]
        y = (jnp.dot(wc0, h_m1, preferred_element_type=jnp.float32)
             + jnp.dot(wc1, h, preferred_element_type=jnp.float32)
             + jnp.dot(wc2, h_p1, preferred_element_type=jnp.float32)
             + bc)                                              # (Cout, L)
        ys.append(y)
        total = total + jnp.sum(y, axis=1, keepdims=True)

    # ---- BatchNorm (training mode, biased var) -- two-pass, in VMEM -------
    cnt = jnp.float32(N * L)
    mean = total / cnt                                          # (Cout, 1)
    ssq = jnp.zeros((Cout, 1), jnp.float32)
    for n in range(N):
        d = ys[n] - mean
        ssq = ssq + jnp.sum(d * d, axis=1, keepdims=True)
    var = ssq / cnt
    inv_std = lax.rsqrt(var + BN_EPS)
    scale = g_ref[...] * inv_std                                # (Cout, 1)
    shift = b_ref[...] - mean * scale                           # (Cout, 1)

    # ---- even/odd interleave selectors: out[:, 2t+k] = v_k[:, t] ----------
    t_idx = lax.broadcasted_iota(jnp.int32, (L, L2), 0)
    j_idx = lax.broadcasted_iota(jnp.int32, (L, L2), 1)
    p0 = (j_idx == 2 * t_idx).astype(jnp.float32)               # (L, 2L)
    p1 = (j_idx == 2 * t_idx + 1).astype(jnp.float32)           # (L, 2L)

    wu0 = wu0_ref[...]                                          # (Cout, Cout)
    wu1 = wu1_ref[...]                                          # (Cout, Cout)
    bu = bu_ref[...]                                            # (Cout, 1)

    # ---- BN affine + ReLU + fused ConvTranspose, final-layout store -------
    for n in range(N):
        yn = jnp.maximum(ys[n] * scale + shift, 0.0)            # (Cout, L)
        v0 = jnp.dot(wu0, yn, preferred_element_type=jnp.float32)  # tap k=0
        v1 = jnp.dot(wu1, yn, preferred_element_type=jnp.float32)  # tap k=1
        u = (jnp.dot(v0, p0, preferred_element_type=jnp.float32)
             + jnp.dot(v1, p1, preferred_element_type=jnp.float32)
             + bu)                                              # (Cout, 2L)
        o_ref[n] = u                                            # lane-dense store


def decoder_block_forward(x_ncl, params):
    """x_ncl: (N, in_channels + skip_channels, L) float32 (PyTorch NCL)."""
    Wr, br, Wc, bc, gamma, beta, Wu, bu = params
    N, Cin_tot, L = x_ncl.shape
    Cin = Wr.shape[0]
    Cout = Wc.shape[0]
    f32 = jnp.float32

    x = x_ncl.astype(f32)
    # One-time weight repacking (tiny, fused by XLA into constants).
    wr = Wr[:, :, 0].astype(f32)                    # (Cin, Cin_tot)
    wc0 = Wc[:, :, 0].astype(f32)                   # conv tap for h[:, t-1]
    wc1 = Wc[:, :, 1].astype(f32)                   # conv tap for h[:, t]
    wc2 = Wc[:, :, 2].astype(f32)                   # conv tap for h[:, t+1]
    wu0 = Wu[:, :, 0].T.astype(f32)                 # (Cout, Cout), output 2t
    wu1 = Wu[:, :, 1].T.astype(f32)                 # (Cout, Cout), output 2t+1
    br2 = br.reshape(Cin, 1).astype(f32)
    bc2 = bc.reshape(Cout, 1).astype(f32)
    g2 = gamma.reshape(Cout, 1).astype(f32)
    b2 = beta.reshape(Cout, 1).astype(f32)
    bu2 = bu.reshape(Cout, 1).astype(f32)

    out = pl.pallas_call(
        _decoder_block_kernel,
        out_shape=jax.ShapeDtypeStruct((N, Cout, 2 * L), f32),
        compiler_params=pltpu.CompilerParams(vmem_limit_bytes=32 * 1024 * 1024),
        cost_estimate=pl.CostEstimate(
            flops=2 * N * L * (Cin * Cin_tot + 3 * Cout * Cin
                               + 2 * Cout * Cout + 2 * Cout * 2 * L),
            transcendentals=0,
            bytes_accessed=4 * (N * Cin_tot * L + N * Cout * 2 * L
                                + Cin * Cin_tot + 3 * Cout * Cin + 2 * Cout * Cout),
        ),
    )(x, wr, br2, wc0, wc1, wc2, bc2, g2, b2, wu0, wu1, bu2)
    return out


def decoder_block_reference(x_ncl, params):
    """Independent pure-JAX reference using lax convolutions (NCL)."""
    Wr, br, Wc, bc, gamma, beta, Wu, bu = params
    dn = ('NCH', 'OIH', 'NCH')
    h = lax.conv_general_dilated(x_ncl, Wr, (1,), [(0, 0)], dimension_numbers=dn)
    h = jax.nn.relu(h + br[None, :, None])
    y = lax.conv_general_dilated(h, Wc, (1,), [(1, 1)], dimension_numbers=dn)
    y = y + bc[None, :, None]
    mean = jnp.mean(y, axis=(0, 2), keepdims=True)
    var = jnp.mean((y - mean) ** 2, axis=(0, 2), keepdims=True)
    yn = (y - mean) / jnp.sqrt(var + BN_EPS)
    yn = yn * gamma[None, :, None] + beta[None, :, None]
    h2 = jax.nn.relu(yn)
    # ConvTranspose1d(k=2, s=2, p=0) == lhs-dilated conv with flipped kernel
    Wt = jnp.flip(jnp.transpose(Wu, (1, 0, 2)), axis=2)  # (O, I, k)
    u = lax.conv_general_dilated(h2, Wt, (1,), [(1, 1)], lhs_dilation=(2,),
                                 dimension_numbers=dn)
    return u + bu[None, :, None]


if __name__ == "__main__":
    N, in_channels, skip_channels, out_channels, L = 2, 8, 8, 16, 128
    Cin_tot = in_channels + skip_channels

    key = jax.random.PRNGKey(0)
    ks = jax.random.split(key, 9)
    Wr = 0.2 * jax.random.normal(ks[0], (in_channels, Cin_tot, 1), jnp.float32)
    br = 0.1 * jax.random.normal(ks[1], (in_channels,), jnp.float32)
    Wc = 0.2 * jax.random.normal(ks[2], (out_channels, in_channels, 3), jnp.float32)
    bc = 0.1 * jax.random.normal(ks[3], (out_channels,), jnp.float32)
    gamma = 1.0 + 0.1 * jax.random.normal(ks[4], (out_channels,), jnp.float32)
    beta = 0.1 * jax.random.normal(ks[5], (out_channels,), jnp.float32)
    Wu = 0.2 * jax.random.normal(ks[6], (out_channels, out_channels, 2), jnp.float32)
    bu = 0.1 * jax.random.normal(ks[7], (out_channels,), jnp.float32)
    params = (Wr, br, Wc, bc, gamma, beta, Wu, bu)

    x = jax.random.normal(ks[8], (N, Cin_tot, L), jnp.float32)

    fwd = jax.jit(decoder_block_forward)
    out = jax.block_until_ready(fwd(x, params))
    ref = jax.block_until_ready(decoder_block_reference(x, params))
    assert out.shape == (N, out_channels, 2 * L), out.shape
    np.testing.assert_allclose(np.asarray(out), np.asarray(ref), rtol=1e-3, atol=1e-3)
    print("KERNEL_OK")
</pallas_src>

<mosaic_0001>
module attributes {stable_mosaic.version = 11 : i64} {
  func.func @_decoder_block_kernel(%arg0: memref<2x16x128xf32, #tpu.memory_space<vmem>>, %arg1: memref<8x16xf32, #tpu.memory_space<vmem>>, %arg2: memref<8x1xf32, #tpu.memory_space<vmem>>, %arg3: memref<16x8xf32, #tpu.memory_space<vmem>>, %arg4: memref<16x8xf32, #tpu.memory_space<vmem>>, %arg5: memref<16x8xf32, #tpu.memory_space<vmem>>, %arg6: memref<16x1xf32, #tpu.memory_space<vmem>>, %arg7: memref<16x1xf32, #tpu.memory_space<vmem>>, %arg8: memref<16x1xf32, #tpu.memory_space<vmem>>, %arg9: memref<16x16xf32, #tpu.memory_space<vmem>>, %arg10: memref<16x16xf32, #tpu.memory_space<vmem>>, %arg11: memref<16x1xf32, #tpu.memory_space<vmem>>, %arg12: memref<2x16x256xf32, #tpu.memory_space<vmem>>) attributes {dimension_semantics = [], scalar_prefetch = 0 : i64, scratch_operands = 0 : i64, tpu.core_type = #tpu.core_type<tc>} {
    %c0 = arith.constant 0 : index
    %c0_0 = arith.constant 0 : index
    %0 = vector.load %arg1[%c0, %c0_0] : memref<8x16xf32, #tpu.memory_space<vmem>>, vector<8x16xf32>
    %c0_1 = arith.constant 0 : index
    %c0_2 = arith.constant 0 : index
    %1 = vector.load %arg2[%c0_1, %c0_2] : memref<8x1xf32, #tpu.memory_space<vmem>>, vector<8x1xf32>
    %c0_3 = arith.constant 0 : index
    %c0_4 = arith.constant 0 : index
    %2 = vector.load %arg3[%c0_3, %c0_4] : memref<16x8xf32, #tpu.memory_space<vmem>>, vector<16x8xf32>
    %c0_5 = arith.constant 0 : index
    %c0_6 = arith.constant 0 : index
    %3 = vector.load %arg4[%c0_5, %c0_6] : memref<16x8xf32, #tpu.memory_space<vmem>>, vector<16x8xf32>
    %c0_7 = arith.constant 0 : index
    %c0_8 = arith.constant 0 : index
    %4 = vector.load %arg5[%c0_7, %c0_8] : memref<16x8xf32, #tpu.memory_space<vmem>>, vector<16x8xf32>
    %c0_9 = arith.constant 0 : index
    %c0_10 = arith.constant 0 : index
    %5 = vector.load %arg6[%c0_9, %c0_10] : memref<16x1xf32, #tpu.memory_space<vmem>>, vector<16x1xf32>
    %6 = tpu.iota {dimensions = array<i32: 1>} : vector<8x128xi32>
    %cst = arith.constant 0.000000e+00 : f32
    %7 = vector.broadcast %cst : f32 to vector<16x1xf32>
    %c0_11 = arith.constant 0 : index
    %c0_12 = arith.constant 0 : index
    %c0_13 = arith.constant 0 : index
    %8 = vector.load %arg0[%c0_11, %c0_12, %c0_13] : memref<2x16x128xf32, #tpu.memory_space<vmem>>, vector<1x16x128xf32>
    %9 = vector.shape_cast %8 : vector<1x16x128xf32> to vector<16x128xf32>
    %cst_14 = arith.constant dense<0.000000e+00> : vector<8x128xf32>
    %10 = tpu.matmul %0, %9, %cst_14 {dimension_numbers = #tpu.dot_dimension_numbers<[1], [0], [0], [1], [0, 0, 1, 1], [], []>} : vector<8x16xf32>, vector<16x128xf32>, vector<8x128xf32> -> vector<8x128xf32>
    %11 = vector.broadcast %1 : vector<8x1xf32> to vector<8x128xf32>
    %12 = arith.addf %10, %11 : vector<8x128xf32>
    %cst_15 = arith.constant 0.000000e+00 : f32
    %13 = vector.broadcast %cst_15 : f32 to vector<8x128xf32>
    %14 = arith.maximumf %12, %13 : vector<8x128xf32>
    %c0_i32 = arith.constant 0 : i32
    %15 = vector.broadcast %c0_i32 : i32 to vector<8x128xi32>
    %16 = arith.cmpi eq, %6, %15 : vector<8x128xi32>
    %c1_i32 = arith.constant 1 : i32
    %17 = tpu.dynamic_rotate %14 by %c1_i32 dim 1 : vector<8x128xf32>, i32 -> vector<8x128xf32>
    %cst_16 = arith.constant 0.000000e+00 : f32
    %18 = vector.broadcast %cst_16 : f32 to vector<8x128xf32>
    %19 = arith.select %16, %18, %17 : vector<8x128xi1>, vector<8x128xf32>
    %c127_i32 = arith.constant 127 : i32
    %20 = vector.broadcast %c127_i32 : i32 to vector<8x128xi32>
    %21 = arith.cmpi eq, %6, %20 : vector<8x128xi32>
    %c127_i32_17 = arith.constant 127 : i32
    %22 = tpu.dynamic_rotate %14 by %c127_i32_17 dim 1 : vector<8x128xf32>, i32 -> vector<8x128xf32>
    %cst_18 = arith.constant 0.000000e+00 : f32
    %23 = vector.broadcast %cst_18 : f32 to vector<8x128xf32>
    %24 = arith.select %21, %23, %22 : vector<8x128xi1>, vector<8x128xf32>
    %cst_19 = arith.constant dense<0.000000e+00> : vector<16x128xf32>
    %25 = tpu.matmul %2, %19, %cst_19 {dimension_numbers = #tpu.dot_dimension_numbers<[1], [0], [0], [1], [0, 0, 1, 1], [], []>} : vector<16x8xf32>, vector<8x128xf32>, vector<16x128xf32> -> vector<16x128xf32>
    %cst_20 = arith.constant dense<0.000000e+00> : vector<16x128xf32>
    %26 = tpu.matmul %3, %14, %cst_20 {dimension_numbers = #tpu.dot_dimension_numbers<[1], [0], [0], [1], [0, 0, 1, 1], [], []>} : vector<16x8xf32>, vector<8x128xf32>, vector<16x128xf32> -> vector<16x128xf32>
    %27 = arith.addf %25, %26 : vector<16x128xf32>
    %cst_21 = arith.constant dense<0.000000e+00> : vector<16x128xf32>
    %28 = tpu.matmul %4, %24, %cst_21 {dimension_numbers = #tpu.dot_dimension_numbers<[1], [0], [0], [1], [0, 0, 1, 1], [], []>} : vector<16x8xf32>, vector<8x128xf32>, vector<16x128xf32> -> vector<16x128xf32>
    %29 = arith.addf %27, %28 : vector<16x128xf32>
    %30 = vector.broadcast %5 : vector<16x1xf32> to vector<16x128xf32>
    %31 = arith.addf %29, %30 : vector<16x128xf32>
    %cst_22 = arith.constant dense<0.000000e+00> : vector<16xf32>
    %32 = vector.multi_reduction <add>, %31, %cst_22 [1] : vector<16x128xf32> to vector<16xf32>
    %33 = vector.shape_cast %32 : vector<16xf32> to vector<16x1xf32>
    %34 = arith.addf %7, %33 : vector<16x1xf32>
    %c1 = arith.constant 1 : index
    %c0_23 = arith.constant 0 : index
    %c0_24 = arith.constant 0 : index
    %35 = vector.load %arg0[%c1, %c0_23, %c0_24] : memref<2x16x128xf32, #tpu.memory_space<vmem>>, vector<1x16x128xf32>
    %36 = vector.shape_cast %35 : vector<1x16x128xf32> to vector<16x128xf32>
    %cst_25 = arith.constant dense<0.000000e+00> : vector<8x128xf32>
    %37 = tpu.matmul %0, %36, %cst_25 {dimension_numbers = #tpu.dot_dimension_numbers<[1], [0], [0], [1], [0, 0, 1, 1], [], []>} : vector<8x16xf32>, vector<16x128xf32>, vector<8x128xf32> -> vector<8x128xf32>
    %38 = vector.broadcast %1 : vector<8x1xf32> to vector<8x128xf32>
    %39 = arith.addf %37, %38 : vector<8x128xf32>
    %cst_26 = arith.constant 0.000000e+00 : f32
    %40 = vector.broadcast %cst_26 : f32 to vector<8x128xf32>
    %41 = arith.maximumf %39, %40 : vector<8x128xf32>
    %c0_i32_27 = arith.constant 0 : i32
    %42 = vector.broadcast %c0_i32_27 : i32 to vector<8x128xi32>
    %43 = arith.cmpi eq, %6, %42 : vector<8x128xi32>
    %c1_i32_28 = arith.constant 1 : i32
    %44 = tpu.dynamic_rotate %41 by %c1_i32_28 dim 1 : vector<8x128xf32>, i32 -> vector<8x128xf32>
    %cst_29 = arith.constant 0.000000e+00 : f32
    %45 = vector.broadcast %cst_29 : f32 to vector<8x128xf32>
    %46 = arith.select %43, %45, %44 : vector<8x128xi1>, vector<8x128xf32>
    %c127_i32_30 = arith.constant 127 : i32
    %47 = vector.broadcast %c127_i32_30 : i32 to vector<8x128xi32>
    %48 = arith.cmpi eq, %6, %47 : vector<8x128xi32>
    %c127_i32_31 = arith.constant 127 : i32
    %49 = tpu.dynamic_rotate %41 by %c127_i32_31 dim 1 : vector<8x128xf32>, i32 -> vector<8x128xf32>
    %cst_32 = arith.constant 0.000000e+00 : f32
    %50 = vector.broadcast %cst_32 : f32 to vector<8x128xf32>
    %51 = arith.select %48, %50, %49 : vector<8x128xi1>, vector<8x128xf32>
    %cst_33 = arith.constant dense<0.000000e+00> : vector<16x128xf32>
    %52 = tpu.matmul %2, %46, %cst_33 {dimension_numbers = #tpu.dot_dimension_numbers<[1], [0], [0], [1], [0, 0, 1, 1], [], []>} : vector<16x8xf32>, vector<8x128xf32>, vector<16x128xf32> -> vector<16x128xf32>
    %cst_34 = arith.constant dense<0.000000e+00> : vector<16x128xf32>
    %53 = tpu.matmul %3, %41, %cst_34 {dimension_numbers = #tpu.dot_dimension_numbers<[1], [0], [0], [1], [0, 0, 1, 1], [], []>} : vector<16x8xf32>, vector<8x128xf32>, vector<16x128xf32> -> vector<16x128xf32>
    %54 = arith.addf %52, %53 : vector<16x128xf32>
    %cst_35 = arith.constant dense<0.000000e+00> : vector<16x128xf32>
    %55 = tpu.matmul %4, %51, %cst_35 {dimension_numbers = #tpu.dot_dimension_numbers<[1], [0], [0], [1], [0, 0, 1, 1], [], []>} : vector<16x8xf32>, vector<8x128xf32>, vector<16x128xf32> -> vector<16x128xf32>
    %56 = arith.addf %54, %55 : vector<16x128xf32>
    %57 = vector.broadcast %5 : vector<16x1xf32> to vector<16x128xf32>
    %58 = arith.addf %56, %57 : vector<16x128xf32>
    %cst_36 = arith.constant dense<0.000000e+00> : vector<16xf32>
    %59 = vector.multi_reduction <add>, %58, %cst_36 [1] : vector<16x128xf32> to vector<16xf32>
    %60 = vector.shape_cast %59 : vector<16xf32> to vector<16x1xf32>
    %61 = arith.addf %34, %60 : vector<16x1xf32>
    %cst_37 = arith.constant 2.560000e+02 : f32
    %62 = vector.broadcast %cst_37 : f32 to vector<16x1xf32>
    %63 = arith.divf %61, %62 : vector<16x1xf32>
    %cst_38 = arith.constant 0.000000e+00 : f32
    %64 = vector.broadcast %cst_38 : f32 to vector<16x1xf32>
    %65 = vector.broadcast %63 : vector<16x1xf32> to vector<16x128xf32>
    %66 = arith.subf %31, %65 : vector<16x128xf32>
    %67 = arith.mulf %66, %66 : vector<16x128xf32>
    %cst_39 = arith.constant dense<0.000000e+00> : vector<16xf32>
    %68 = vector.multi_reduction <add>, %67, %cst_39 [1] : vector<16x128xf32> to vector<16xf32>
    %69 = vector.shape_cast %68 : vector<16xf32> to vector<16x1xf32>
    %70 = arith.addf %64, %69 : vector<16x1xf32>
    %71 = vector.broadcast %63 : vector<16x1xf32> to vector<16x128xf32>
    %72 = arith.subf %58, %71 : vector<16x128xf32>
    %73 = arith.mulf %72, %72 : vector<16x128xf32>
    %cst_40 = arith.constant dense<0.000000e+00> : vector<16xf32>
    %74 = vector.multi_reduction <add>, %73, %cst_40 [1] : vector<16x128xf32> to vector<16xf32>
    %75 = vector.shape_cast %74 : vector<16xf32> to vector<16x1xf32>
    %76 = arith.addf %70, %75 : vector<16x1xf32>
    %cst_41 = arith.constant 2.560000e+02 : f32
    %77 = vector.broadcast %cst_41 : f32 to vector<16x1xf32>
    %78 = arith.divf %76, %77 : vector<16x1xf32>
    %cst_42 = arith.constant 9.99999974E-6 : f32
    %79 = vector.broadcast %cst_42 : f32 to vector<16x1xf32>
    %80 = arith.addf %78, %79 : vector<16x1xf32>
    %81 = math.rsqrt %80 : vector<16x1xf32>
    %c0_43 = arith.constant 0 : index
    %c0_44 = arith.constant 0 : index
    %82 = vector.load %arg7[%c0_43, %c0_44] : memref<16x1xf32, #tpu.memory_space<vmem>>, vector<16x1xf32>
    %83 = arith.mulf %82, %81 : vector<16x1xf32>
    %c0_45 = arith.constant 0 : index
    %c0_46 = arith.constant 0 : index
    %84 = vector.load %arg8[%c0_45, %c0_46] : memref<16x1xf32, #tpu.memory_space<vmem>>, vector<16x1xf32>
    %85 = arith.mulf %63, %83 : vector<16x1xf32>
    %86 = arith.subf %84, %85 : vector<16x1xf32>
    %87 = tpu.iota {dimensions = array<i32: 0>} : vector<128x256xi32>
    %88 = tpu.iota {dimensions = array<i32: 1>} : vector<128x256xi32>
    %c2_i32 = arith.constant 2 : i32
    %89 = vector.broadcast %c2_i32 : i32 to vector<128x256xi32>
    %90 = arith.muli %89, %87 : vector<128x256xi32>
    %91 = arith.cmpi eq, %88, %90 : vector<128x256xi32>
    %92 = arith.extui %91 : vector<128x256xi1> to vector<128x256xi32>
    %93 = arith.sitofp %92 : vector<128x256xi32> to vector<128x256xf32>
    %c2_i32_47 = arith.constant 2 : i32
    %94 = vector.broadcast %c2_i32_47 : i32 to vector<128x256xi32>
    %95 = arith.muli %94, %87 : vector<128x256xi32>
    %c1_i32_48 = arith.constant 1 : i32
    %96 = vector.broadcast %c1_i32_48 : i32 to vector<128x256xi32>
    %97 = arith.addi %95, %96 : vector<128x256xi32>
    %98 = arith.cmpi eq, %88, %97 : vector<128x256xi32>
    %99 = arith.extui %98 : vector<128x256xi1> to vector<128x256xi32>
    %100 = arith.sitofp %99 : vector<128x256xi32> to vector<128x256xf32>
    %c0_49 = arith.constant 0 : index
    %c0_50 = arith.constant 0 : index
    %101 = vector.load %arg9[%c0_49, %c0_50] : memref<16x16xf32, #tpu.memory_space<vmem>>, vector<16x16xf32>
    %c0_51 = arith.constant 0 : index
    %c0_52 = arith.constant 0 : index
    %102 = vector.load %arg10[%c0_51, %c0_52] : memref<16x16xf32, #tpu.memory_space<vmem>>, vector<16x16xf32>
    %c0_53 = arith.constant 0 : index
    %c0_54 = arith.constant 0 : index
    %103 = vector.load %arg11[%c0_53, %c0_54] : memref<16x1xf32, #tpu.memory_space<vmem>>, vector<16x1xf32>
    %104 = vector.broadcast %83 : vector<16x1xf32> to vector<16x128xf32>
    %105 = arith.mulf %31, %104 : vector<16x128xf32>
    %106 = vector.broadcast %86 : vector<16x1xf32> to vector<16x128xf32>
    %107 = arith.addf %105, %106 : vector<16x128xf32>
    %cst_55 = arith.constant 0.000000e+00 : f32
    %108 = vector.broadcast %cst_55 : f32 to vector<16x128xf32>
    %109 = arith.maximumf %107, %108 : vector<16x128xf32>
    %cst_56 = arith.constant dense<0.000000e+00> : vector<16x128xf32>
    %110 = tpu.matmul %101, %109, %cst_56 {dimension_numbers = #tpu.dot_dimension_numbers<[1], [0], [0], [1], [0, 0, 1, 1], [], []>} : vector<16x16xf32>, vector<16x128xf32>, vector<16x128xf32> -> vector<16x128xf32>
    %cst_57 = arith.constant dense<0.000000e+00> : vector<16x128xf32>
    %111 = tpu.matmul %102, %109, %cst_57 {dimension_numbers = #tpu.dot_dimension_numbers<[1], [0], [0], [1], [0, 0, 1, 1], [], []>} : vector<16x16xf32>, vector<16x128xf32>, vector<16x128xf32> -> vector<16x128xf32>
    %cst_58 = arith.constant dense<0.000000e+00> : vector<16x256xf32>
    %112 = tpu.matmul %110, %93, %cst_58 {dimension_numbers = #tpu.dot_dimension_numbers<[1], [0], [0], [1], [0, 0, 1, 1], [], []>} : vector<16x128xf32>, vector<128x256xf32>, vector<16x256xf32> -> vector<16x256xf32>
    %cst_59 = arith.constant dense<0.000000e+00> : vector<16x256xf32>
    %113 = tpu.matmul %111, %100, %cst_59 {dimension_numbers = #tpu.dot_dimension_numbers<[1], [0], [0], [1], [0, 0, 1, 1], [], []>} : vector<16x128xf32>, vector<128x256xf32>, vector<16x256xf32> -> vector<16x256xf32>
    %114 = arith.addf %112, %113 : vector<16x256xf32>
    %115 = vector.broadcast %103 : vector<16x1xf32> to vector<16x256xf32>
    %116 = arith.addf %114, %115 : vector<16x256xf32>
    %c0_60 = arith.constant 0 : index
    %c0_61 = arith.constant 0 : index
    %c0_62 = arith.constant 0 : index
    %117 = vector.load %arg12[%c0_60, %c0_61, %c0_62] : memref<2x16x256xf32, #tpu.memory_space<vmem>>, vector<1x16x256xf32>
    %118 = vector.shape_cast %117 : vector<1x16x256xf32> to vector<16x256xf32>
    %119 = vector.shape_cast %116 : vector<16x256xf32> to vector<1x16x256xf32>
    tpu.vector_store %arg12[%c0_60, %c0_61, %c0_62], %119 {strides = array<i32>} : memref<2x16x256xf32, #tpu.memory_space<vmem>>, vector<1x16x256xf32>,
    %120 = vector.broadcast %83 : vector<16x1xf32> to vector<16x128xf32>
    %121 = arith.mulf %58, %120 : vector<16x128xf32>
    %122 = vector.broadcast %86 : vector<16x1xf32> to vector<16x128xf32>
    %123 = arith.addf %121, %122 : vector<16x128xf32>
    %cst_63 = arith.constant 0.000000e+00 : f32
    %124 = vector.broadcast %cst_63 : f32 to vector<16x128xf32>
    %125 = arith.maximumf %123, %124 : vector<16x128xf32>
    %cst_64 = arith.constant dense<0.000000e+00> : vector<16x128xf32>
    %126 = tpu.matmul %101, %125, %cst_64 {dimension_numbers = #tpu.dot_dimension_numbers<[1], [0], [0], [1], [0, 0, 1, 1], [], []>} : vector<16x16xf32>, vector<16x128xf32>, vector<16x128xf32> -> vector<16x128xf32>
    %cst_65 = arith.constant dense<0.000000e+00> : vector<16x128xf32>
    %127 = tpu.matmul %102, %125, %cst_65 {dimension_numbers = #tpu.dot_dimension_numbers<[1], [0], [0], [1], [0, 0, 1, 1], [], []>} : vector<16x16xf32>, vector<16x128xf32>, vector<16x128xf32> -> vector<16x128xf32>
    %cst_66 = arith.constant dense<0.000000e+00> : vector<16x256xf32>
    %128 = tpu.matmul %126, %93, %cst_66 {dimension_numbers = #tpu.dot_dimension_numbers<[1], [0], [0], [1], [0, 0, 1, 1], [], []>} : vector<16x128xf32>, vector<128x256xf32>, vector<16x256xf32> -> vector<16x256xf32>
    %cst_67 = arith.constant dense<0.000000e+00> : vector<16x256xf32>
    %129 = tpu.matmul %127, %100, %cst_67 {dimension_numbers = #tpu.dot_dimension_numbers<[1], [0], [0], [1], [0, 0, 1, 1], [], []>} : vector<16x128xf32>, vector<128x256xf32>, vector<16x256xf32> -> vector<16x256xf32>
    %130 = arith.addf %128, %129 : vector<16x256xf32>
    %131 = vector.broadcast %103 : vector<16x1xf32> to vector<16x256xf32>
    %132 = arith.addf %130, %131 : vector<16x256xf32>
    %c1_68 = arith.constant 1 : index
    %c0_69 = arith.constant 0 : index
    %c0_70 = arith.constant 0 : index
    %133 = vector.load %arg12[%c1_68, %c0_69, %c0_70] : memref<2x16x256xf32, #tpu.memory_space<vmem>>, vector<1x16x256xf32>
    %134 = vector.shape_cast %133 : vector<1x16x256xf32> to vector<16x256xf32>
    %135 = vector.shape_cast %132 : vector<16x256xf32> to vector<1x16x256xf32>
    tpu.vector_store %arg12[%c1_68, %c0_69, %c0_70], %135 {strides = array<i32>} : memref<2x16x256xf32, #tpu.memory_space<vmem>>, vector<1x16x256xf32>,
    return
  }
}

</mosaic_0001>

<llo_original>
// kernel: decoder_block_forward.1
$region0: #{decoder_block_forward.1}
  #allocation0 [shape = 'u32[]', space=smem, size = 0x4, offset = 0x4, fixed_abs, tag = 'smem constant byte address 0x4 - core index']
  #allocation1 [shape = 'u32[144,128]{1,0:T(1,128)}', space=vmem, size = 0x12000, scoped, tag = 'internal scratch']
  %s0 = inlined_call_operand.vmem [shape: f32[2,16,128], index: 0, kind: input, shape index: {}]
  %s1 = inlined_call_operand.vmem [shape: f32[8,16], index: 1, kind: input, shape index: {}]
  %s2 = inlined_call_operand.vmem [shape: f32[8,1], index: 2, kind: input, shape index: {}]
  %s3 = inlined_call_operand.vmem [shape: f32[16,8], index: 3, kind: input, shape index: {}]
  %s4 = inlined_call_operand.vmem [shape: f32[16,8], index: 4, kind: input, shape index: {}]
  %s5 = inlined_call_operand.vmem [shape: f32[16,8], index: 5, kind: input, shape index: {}]
  %s6 = inlined_call_operand.vmem [shape: f32[16,1], index: 6, kind: input, shape index: {}]
  %s7 = inlined_call_operand.vmem [shape: f32[16,1], index: 7, kind: input, shape index: {}]
  %s8 = inlined_call_operand.vmem [shape: f32[16,1], index: 8, kind: input, shape index: {}]
  %s9 = inlined_call_operand.vmem [shape: f32[16,16], index: 9, kind: input, shape index: {}]
  %s10 = inlined_call_operand.vmem [shape: f32[16,16], index: 10, kind: input, shape index: {}]
  %s11 = inlined_call_operand.vmem [shape: f32[16,1], index: 11, kind: input, shape index: {}]
  %s12 = inlined_call_operand.hbm [shape: f32[2,16,256], index: 12, kind: output, shape index: {}]
  %s13 = sld [smem:[#allocation0]]
  $region58: #{decoder_block_forward.1} parent=0
    _
  %s15 = ssub.s32 1, %s13
  %s16 = scalar_select 0, %s15, %s13
  $region1: #{decoder_block_forward.1} parent=0
    #allocation2 [shape = 'u8[32768]{0}', space=vmem, size = 0x8000, scoped, tag = 'output window, operand 0, single buffered']
    #allocation3 [shape = 's32[1]{0}', space=sflag, size = 0x4, scoped, tag = 'scoped memory for decoder_block_forward.1']
    %17 = vsyncpa [#allocation3], 0
    // Predicated region
    $region2: #{decoder_block_forward.1} parent=1 // pred_check
      _
    $region3: #{decoder_block_forward.1} parent=1 // pred_check_branch
      %19 = sbr.rel (0) target = $region5
    $region4: #{decoder_block_forward.1} parent=1 // pred_region
      _
    $region5: #{decoder_block_forward.1} parent=1 // pred_fallthru
      _
    // Predicated region
    $region6: #{decoder_block_forward.1} parent=1 // pred_check
      _
    $region7: #{decoder_block_forward.1} parent=1 // pred_check_branch
      %21 = sbr.rel (0) target = $region9
    $region8: #{decoder_block_forward.1} parent=1 // pred_region
      _
    $region9: #{decoder_block_forward.1} parent=1 // pred_fallthru
      _
    // Predicated region
    $region10: #{decoder_block_forward.1} parent=1 // pred_check
      _
    $region11: #{decoder_block_forward.1} parent=1 // pred_check_branch
      %23 = sbr.rel (0) target = $region13
    $region12: #{decoder_block_forward.1} parent=1 // pred_region
      _
    $region13: #{decoder_block_forward.1} parent=1 // pred_fallthru
      _
    // Predicated region
    $region14: #{decoder_block_forward.1} parent=1 // pred_check
      _
    $region15: #{decoder_block_forward.1} parent=1 // pred_check_branch
      %25 = sbr.rel (0) target = $region17
    $region16: #{decoder_block_forward.1} parent=1 // pred_region
      _
    $region17: #{decoder_block_forward.1} parent=1 // pred_fallthru
      _
    // Predicated region
    $region18: #{decoder_block_forward.1} parent=1 // pred_check
      _
    $region19: #{decoder_block_forward.1} parent=1 // pred_check_branch
      %27 = sbr.rel (0) target = $region21
    $region20: #{decoder_block_forward.1} parent=1 // pred_region
      _
    $region21: #{decoder_block_forward.1} parent=1 // pred_fallthru
      _
    // Predicated region
    $region22: #{decoder_block_forward.1} parent=1 // pred_check
      _
    $region23: #{decoder_block_forward.1} parent=1 // pred_check_branch
      %29 = sbr.rel (0) target = $region25
    $region24: #{decoder_block_forward.1} parent=1 // pred_region
      _
    $region25: #{decoder_block_forward.1} parent=1 // pred_fallthru
      _
    // Predicated region
    $region26: #{decoder_block_forward.1} parent=1 // pred_check
      _
    $region27: #{decoder_block_forward.1} parent=1 // pred_check_branch
      %31 = sbr.rel (0) target = $region29
    $region28: #{decoder_block_forward.1} parent=1 // pred_region
      _
    $region29: #{decoder_block_forward.1} parent=1 // pred_fallthru
      _
    // Predicated region
    $region30: #{decoder_block_forward.1} parent=1 // pred_check
      _
    $region31: #{decoder_block_forward.1} parent=1 // pred_check_branch
      %33 = sbr.rel (0) target = $region33
    $region32: #{decoder_block_forward.1} parent=1 // pred_region
      _
    $region33: #{decoder_block_forward.1} parent=1 // pred_fallthru
      _
    // Predicated region
    $region34: #{decoder_block_forward.1} parent=1 // pred_check
      _
    $region35: #{decoder_block_forward.1} parent=1 // pred_check_branch
      %35 = sbr.rel (0) target = $region37
    $region36: #{decoder_block_forward.1} parent=1 // pred_region
      _
    $region37: #{decoder_block_forward.1} parent=1 // pred_fallthru
      _
    // Predicated region
    $region38: #{decoder_block_forward.1} parent=1 // pred_check
      _
    $region39: #{decoder_block_forward.1} parent=1 // pred_check_branch
      %37 = sbr.rel (0) target = $region41
    $region40: #{decoder_block_forward.1} parent=1 // pred_region
      _
    $region41: #{decoder_block_forward.1} parent=1 // pred_fallthru
      _
    // Predicated region
    $region42: #{decoder_block_forward.1} parent=1 // pred_check
      _
    $region43: #{decoder_block_forward.1} parent=1 // pred_check_branch
      %39 = sbr.rel (0) target = $region45
    $region44: #{decoder_block_forward.1} parent=1 // pred_region
      _
    $region45: #{decoder_block_forward.1} parent=1 // pred_fallthru
      _
    // Predicated region
    $region46: #{decoder_block_forward.1} parent=1 // pred_check
      _
    $region47: #{decoder_block_forward.1} parent=1 // pred_check_branch
      %41 = sbr.rel (0) target = $region49
    $region48: #{decoder_block_forward.1} parent=1 // pred_region
      _
    $region49: #{decoder_block_forward.1} parent=1 // pred_fallthru
      _
    %v42 = vld [vmem:[%s1] sm:$0xff]
    %v43 = vld [vmem:[%s2] sm:$0xff]
    %v44 = vld [vmem:[%s3] sm:$0xff]
    %v45 = vld [vmem:[%s3 + $0x8] sm:$0xff]
    %v46 = vld [vmem:[%s4] sm:$0xff]
    %v47 = vld [vmem:[%s4 + $0x8] sm:$0xff]
    %v48 = vld [vmem:[%s5] sm:$0xff]
    %v49 = vld [vmem:[%s5 + $0x8] sm:$0xff]
    %v50 = vld [vmem:[%s6] sm:$0xff]
    %v51 = vld [vmem:[%s6 + $0x8] sm:$0xff]
    %v52 = vlaneseq
    %v53 = vand.u32 %v52, 127
    %v54 = vld [vmem:[%s0] sm:$0xff]
    %v55 = vld [vmem:[%s0 + $0x8] sm:$0xff]
    %57 = vset.pattern.permute.xlu0 0
    %58 = vperm.xlu0 %57, %v43
    %v59 = vpop.permute.xlu0 %58
    %vm61 = vcmask 130048
    %v63 = vsel %vm61, %v42, 0
    %65 = vmatprep.subr.mxu0 0.0
    %66 = vmatpush1.msra.mxu0 %v54
    %67 = vmatprep.subr.mxu0 0.0
    %68 = vmatpush1.msra.mxu0 %v55
    %69 = vmatprep.subr.mxu0 0.0
    %70 = vmatpush1.msra.mxu0 0.0
    %71 = vmatprep.subr.mxu0 0.0
    %72 = vmatpush1.msra.mxu0 0.0
    %73 = vmatprep.subr.mxu0 0.0
    %74 = vmatpush1.msra.mxu0 0.0
    %75 = vmatprep.subr.mxu0 0.0
    %76 = vmatpush1.msra.mxu0 0.0
    %77 = vmatprep.subr.mxu0 0.0
    %78 = vmatpush1.msra.mxu0 0.0
    %79 = vmatprep.subr.mxu0 0.0
    %80 = vmatpush1.msra.mxu0 0.0
    %81 = vmatprep.subr.mxu0 0.0
    %82 = vmatpush1.msra.mxu0 0.0
    %83 = vmatprep.subr.mxu0 0.0
    %84 = vmatpush1.msra.mxu0 0.0
    %85 = vmatprep.subr.mxu0 0.0
    %86 = vmatpush1.msra.mxu0 0.0
    %87 = vmatprep.subr.mxu0 0.0
    %88 = vmatpush1.msra.mxu0 0.0
    %89 = vmatprep.subr.mxu0 0.0
    %90 = vmatpush1.msra.mxu0 0.0
    %91 = vmatprep.subr.mxu0 0.0
    %92 = vmatpush1.msra.mxu0 0.0
    %93 = vmatprep.subr.mxu0 0.0
    %94 = vmatpush1.msra.mxu0 0.0
    %95 = vmatprep.subr.mxu0 0.0
    %96 = vmatpush1.msra.mxu0 0.0
    %97 = vmatprep.subr.mxu0 0.0
    %98 = vmatpush1.msra.mxu0 0.0
    %99 = vmatprep.subr.mxu0 0.0
    %100 = vmatpush1.msra.mxu0 0.0
    %101 = vmatprep.subr.mxu0 0.0
    %102 = vmatpush1.msra.mxu0 0.0
    %103 = vmatprep.subr.mxu0 0.0
    %104 = vmatpush1.msra.mxu0 0.0
    %105 = vmatprep.subr.mxu0 0.0
    %106 = vmatpush1.msra.mxu0 0.0
    %107 = vmatprep.subr.mxu0 0.0
    %108 = vmatpush1.msra.mxu0 0.0
    %109 = vmatprep.subr.mxu0 0.0
    %110 = vmatpush1.msra.mxu0 0.0
    %111 = vmatprep.subr.mxu0 0.0
    %112 = vmatpush1.msra.mxu0 0.0
    %113 = vmatprep.subr.mxu0 0.0
    %114 = vmatpush1.msra.mxu0 0.0
    %115 = vmatprep.subr.mxu0 0.0
    %116 = vmatpush1.msra.mxu0 0.0
    %117 = vmatprep.subr.mxu0 0.0
    %118 = vmatpush1.msra.mxu0 0.0
    %119 = vmatprep.subr.mxu0 0.0
    %120 = vmatpush1.msra.mxu0 0.0
    %121 = vmatprep.subr.mxu0 0.0
    %122 = vmatpush1.msra.mxu0 0.0
    %123 = vmatprep.subr.mxu0 0.0
    %124 = vmatpush1.msra.mxu0 0.0
    %125 = vmatprep.subr.mxu0 0.0
    %126 = vmatpush1.msra.mxu0 0.0
    %127 = vmatprep.subr.mxu0 0.0
    %128 = vmatpush1.msra.mxu0 0.0
    %129 = vmatprep.mubr.f32.mxu0 0.0
    %130 = vmatmul.mubr.f32.gmra.mrb[0].mxu0 %v63
    %v131 = vpop.f32.mrb[0].mxu0
    %v132 = vadd.f32 %v59, %v131
    %v133 = vpop.f32.mrb[0].mxu0
    %134 = vdwg.mxu0
    %v135 = vmax.f32 %v132, 0.0
    %vm136 = vcmp.eq.s32.totalorder %v53, 0
    %137 = vrot.lane.b32.xlu0 %v135, 1
    %v138 = vpop.permute.xlu0 %137
    %v139 = vsel %vm136, 0.0, %v138
    %vm140 = vcmp.eq.s32.totalorder %v53, 127
    %141 = vrot.lane.b32.xlu0 %v135, 127
    %v142 = vpop.permute.xlu0 %141
    %v143 = vsel %vm140, 0.0, %v142
    %vm144 = vcmask 64512
    %v146 = vsel %vm144, %v46, 0
    %v149 = vsel %vm144, %v47, 0
    %151 = vmatprep.subr.mxu0 0.0
    %152 = vmatpush1.msra.mxu0 %v135
    %153 = vmatprep.subr.mxu0 0.0
    %154 = vmatpush1.msra.mxu0 0.0
    %155 = vmatprep.subr.mxu0 0.0
    %156 = vmatpush1.msra.mxu0 0.0
    %157 = vmatprep.subr.mxu0 0.0
    %158 = vmatpush1.msra.mxu0 0.0
    %159 = vmatprep.subr.mxu0 0.0
    %160 = vmatpush1.msra.mxu0 0.0
    %161 = vmatprep.subr.mxu0 0.0
    %162 = vmatpush1.msra.mxu0 0.0
    %163 = vmatprep.subr.mxu0 0.0
    %164 = vmatpush1.msra.mxu0 0.0
    %165 = vmatprep.subr.mxu0 0.0
    %166 = vmatpush1.msra.mxu0 0.0
    %167 = vmatprep.subr.mxu0 0.0
    %168 = vmatpush1.msra.mxu0 0.0
    %169 = vmatprep.subr.mxu0 0.0
    %170 = vmatpush1.msra.mxu0 0.0
    %171 = vmatprep.subr.mxu0 0.0
    %172 = vmatpush1.msra.mxu0 0.0
    %173 = vmatprep.subr.mxu0 0.0
    %174 = vmatpush1.msra.mxu0 0.0
    %175 = vmatprep.subr.mxu0 0.0
    %176 = vmatpush1.msra.mxu0 0.0
    %177 = vmatprep.subr.mxu0 0.0
    %178 = vmatpush1.msra.mxu0 0.0
    %179 = vmatprep.subr.mxu0 0.0
    %180 = vmatpush1.msra.mxu0 0.0
    %181 = vmatprep.subr.mxu0 0.0
    %182 = vmatpush1.msra.mxu0 0.0
    %183 = vmatprep.subr.mxu0 0.0
    %184 = vmatpush1.msra.mxu0 0.0
    %185 = vmatprep.subr.mxu0 0.0
    %186 = vmatpush1.msra.mxu0 0.0
    %187 = vmatprep.subr.mxu0 0.0
    %188 = vmatpush1.msra.mxu0 0.0
    %189 = vmatprep.subr.mxu0 0.0
    %190 = vmatpush1.msra.mxu0 0.0
    %191 = vmatprep.subr.mxu0 0.0
    %192 = vmatpush1.msra.mxu0 0.0
    %193 = vmatprep.subr.mxu0 0.0
    %194 = vmatpush1.msra.mxu0 0.0
    %195 = vmatprep.subr.mxu0 0.0
    %196 = vmatpush1.msra.mxu0 0.0
    %197 = vmatprep.subr.mxu0 0.0
    %198 = vmatpush1.msra.mxu0 0.0
    %199 = vmatprep.subr.mxu0 0.0
    %200 = vmatpush1.msra.mxu0 0.0
    %201 = vmatprep.subr.mxu0 0.0
    %202 = vmatpush1.msra.mxu0 0.0
    %203 = vmatprep.subr.mxu0 0.0
    %204 = vmatpush1.msra.mxu0 0.0
    %205 = vmatprep.subr.mxu0 0.0
    %206 = vmatpush1.msra.mxu0 0.0
    %207 = vmatprep.subr.mxu0 0.0
    %208 = vmatpush1.msra.mxu0 0.0
    %209 = vmatprep.subr.mxu0 0.0
    %210 = vmatpush1.msra.mxu0 0.0
    %211 = vmatprep.subr.mxu0 0.0
    %212 = vmatpush1.msra.mxu0 0.0
    %213 = vmatprep.subr.mxu0 0.0
    %214 = vmatpush1.msra.mxu0 0.0
    %215 = vmatprep.mubr.f32.mxu0 0.0
    %216 = vmatmul.mubr.f32.gmra.mrb[0].mxu0 %v146
    %v217 = vpop.f32.mrb[0].mxu0
    %v218 = vadd.f32 0.0, %v217
    %v219 = vpop.f32.mrb[0].mxu0
    %220 = vmatprep.mubr.f32.mxu0 0.0
    %221 = vmatmul.mubr.f32.gmra.mrb[0].mxu0 %v149
    %v222 = vpop.f32.mrb[0].mxu0
    %v223 = vadd.f32 0.0, %v222
    %v224 = vpop.f32.mrb[0].mxu0
    %225 = vdwg.mxu0
    %v227 = vsel %vm144, %v44, 0
    %v230 = vsel %vm144, %v45, 0
    %232 = vmatprep.subr.mxu0 0.0
    %233 = vmatpush1.msra.mxu0 %v139
    %234 = vmatprep.subr.mxu0 0.0
    %235 = vmatpush1.msra.mxu0 0.0
    %236 = vmatprep.subr.mxu0 0.0
    %237 = vmatpush1.msra.mxu0 0.0
    %238 = vmatprep.subr.mxu0 0.0
    %239 = vmatpush1.msra.mxu0 0.0
    %240 = vmatprep.subr.mxu0 0.0
    %241 = vmatpush1.msra.mxu0 0.0
    %242 = vmatprep.subr.mxu0 0.0
    %243 = vmatpush1.msra.mxu0 0.0
    %244 = vmatprep.subr.mxu0 0.0
    %245 = vmatpush1.msra.mxu0 0.0
    %246 = vmatprep.subr.mxu0 0.0
    %247 = vmatpush1.msra.mxu0 0.0
    %248 = vmatprep.subr.mxu0 0.0
    %249 = vmatpush1.msra.mxu0 0.0
    %250 = vmatprep.subr.mxu0 0.0
    %251 = vmatpush1.msra.mxu0 0.0
    %252 = vmatprep.subr.mxu0 0.0
    %253 = vmatpush1.msra.mxu0 0.0
    %254 = vmatprep.subr.mxu0 0.0
    %255 = vmatpush1.msra.mxu0 0.0
    %256 = vmatprep.subr.mxu0 0.0
    %257 = vmatpush1.msra.mxu0 0.0
    %258 = vmatprep.subr.mxu0 0.0
    %259 = vmatpush1.msra.mxu0 0.0
    %260 = vmatprep.subr.mxu0 0.0
    %261 = vmatpush1.msra.mxu0 0.0
    %262 = vmatprep.subr.mxu0 0.0
    %263 = vmatpush1.msra.mxu0 0.0
    %264 = vmatprep.subr.mxu0 0.0
    %265 = vmatpush1.msra.mxu0 0.0
    %266 = vmatprep.subr.mxu0 0.0
    %267 = vmatpush1.msra.mxu0 0.0
    %268 = vmatprep.subr.mxu0 0.0
    %269 = vmatpush1.msra.mxu0 0.0
    %270 = vmatprep.subr.mxu0 0.0
    %271 = vmatpush1.msra.mxu0 0.0
    %272 = vmatprep.subr.mxu0 0.0
    %273 = vmatpush1.msra.mxu0 0.0
    %274 = vmatprep.subr.mxu0 0.0
    %275 = vmatpush1.msra.mxu0 0.0
    %276 = vmatprep.subr.mxu0 0.0
    %277 = vmatpush1.msra.mxu0 0.0
    %278 = vmatprep.subr.mxu0 0.0
    %279 = vmatpush1.msra.mxu0 0.0
    %280 = vmatprep.subr.mxu0 0.0
    %281 = vmatpush1.msra.mxu0 0.0
    %282 = vmatprep.subr.mxu0 0.0
    %283 = vmatpush1.msra.mxu0 0.0
    %284 = vmatprep.subr.mxu0 0.0
    %285 = vmatpush1.msra.mxu0 0.0
    %286 = vmatprep.subr.mxu0 0.0
    %287 = vmatpush1.msra.mxu0 0.0
    %288 = vmatprep.subr.mxu0 0.0
    %289 = vmatpush1.msra.mxu0 0.0
    %290 = vmatprep.subr.mxu0 0.0
    %291 = vmatpush1.msra.mxu0 0.0
    %292 = vmatprep.subr.mxu0 0.0
    %293 = vmatpush1.msra.mxu0 0.0
    %294 = vmatprep.subr.mxu0 0.0
    %295 = vmatpush1.msra.mxu0 0.0
    %296 = vmatprep.mubr.f32.mxu0 0.0
    %297 = vmatmul.mubr.f32.gmra.mrb[0].mxu0 %v227
    %v298 = vpop.f32.mrb[0].mxu0
    %v299 = vadd.f32 %v218, %v298
    %v300 = vpop.f32.mrb[0].mxu0
    %301 = vmatprep.mubr.f32.mxu0 0.0
    %302 = vmatmul.mubr.f32.gmra.mrb[0].mxu0 %v230
    %v303 = vpop.f32.mrb[0].mxu0
    %v304 = vadd.f32 %v223, %v303
    %v305 = vpop.f32.mrb[0].mxu0
    %306 = vdwg.mxu0
    %v308 = vsel %vm144, %v48, 0
    %v311 = vsel %vm144, %v49, 0
    %313 = vmatprep.subr.mxu0 0.0
    %314 = vmatpush1.msra.mxu0 %v143
    %315 = vmatprep.subr.mxu0 0.0
    %316 = vmatpush1.msra.mxu0 0.0
    %317 = vmatprep.subr.mxu0 0.0
    %318 = vmatpush1.msra.mxu0 0.0
    %319 = vmatprep.subr.mxu0 0.0
    %320 = vmatpush1.msra.mxu0 0.0
    %321 = vmatprep.subr.mxu0 0.0
    %322 = vmatpush1.msra.mxu0 0.0
    %323 = vmatprep.subr.mxu0 0.0
    %324 = vmatpush1.msra.mxu0 0.0
    %325 = vmatprep.subr.mxu0 0.0
    %326 = vmatpush1.msra.mxu0 0.0
    %327 = vmatprep.subr.mxu0 0.0
    %328 = vmatpush1.msra.mxu0 0.0
    %329 = vmatprep.subr.mxu0 0.0
    %330 = vmatpush1.msra.mxu0 0.0
    %331 = vmatprep.subr.mxu0 0.0
    %332 = vmatpush1.msra.mxu0 0.0
    %333 = vmatprep.subr.mxu0 0.0
    %334 = vmatpush1.msra.mxu0 0.0
    %335 = vmatprep.subr.mxu0 0.0
    %336 = vmatpush1.msra.mxu0 0.0
    %337 = vmatprep.subr.mxu0 0.0
    %338 = vmatpush1.msra.mxu0 0.0
    %339 = vmatprep.subr.mxu0 0.0
    %340 = vmatpush1.msra.mxu0 0.0
    %341 = vmatprep.subr.mxu0 0.0
    %342 = vmatpush1.msra.mxu0 0.0
    %343 = vmatprep.subr.mxu0 0.0
    %344 = vmatpush1.msra.mxu0 0.0
    %345 = vmatprep.subr.mxu0 0.0
    %346 = vmatpush1.msra.mxu0 0.0
    %347 = vmatprep.subr.mxu0 0.0
    %348 = vmatpush1.msra.mxu0 0.0
    %349 = vmatprep.subr.mxu0 0.0
    %350 = vmatpush1.msra.mxu0 0.0
    %351 = vmatprep.subr.mxu0 0.0
    %352 = vmatpush1.msra.mxu0 0.0
    %353 = vmatprep.subr.mxu0 0.0
    %354 = vmatpush1.msra.mxu0 0.0
    %355 = vmatprep.subr.mxu0 0.0
    %356 = vmatpush1.msra.mxu0 0.0
    %357 = vmatprep.subr.mxu0 0.0
    %358 = vmatpush1.msra.mxu0 0.0
    %359 = vmatprep.subr.mxu0 0.0
    %360 = vmatpush1.msra.mxu0 0.0
    %361 = vmatprep.subr.mxu0 0.0
    %362 = vmatpush1.msra.mxu0 0.0
    %363 = vmatprep.subr.mxu0 0.0
    %364 = vmatpush1.msra.mxu0 0.0
    %365 = vmatprep.subr.mxu0 0.0
    %366 = vmatpush1.msra.mxu0 0.0
    %367 = vmatprep.subr.mxu0 0.0
    %368 = vmatpush1.msra.mxu0 0.0
    %369 = vmatprep.subr.mxu0 0.0
    %370 = vmatpush1.msra.mxu0 0.0
    %371 = vmatprep.subr.mxu0 0.0
    %372 = vmatpush1.msra.mxu0 0.0
    %373 = vmatprep.subr.mxu0 0.0
    %374 = vmatpush1.msra.mxu0 0.0
    %375 = vmatprep.subr.mxu0 0.0
    %376 = vmatpush1.msra.mxu0 0.0
    %377 = vmatprep.mubr.f32.mxu0 0.0
    %378 = vmatmul.mubr.f32.gmra.mrb[0].mxu0 %v308
    %v379 = vpop.f32.mrb[0].mxu0
    %v380 = vadd.f32 0.0, %v379
    %v381 = vpop.f32.mrb[0].mxu0
    %382 = vmatprep.mubr.f32.mxu0 0.0
    %383 = vmatmul.mubr.f32.gmra.mrb[0].mxu0 %v311
    %v384 = vpop.f32.mrb[0].mxu0
    %v385 = vadd.f32 0.0, %v384
    %v386 = vpop.f32.mrb[0].mxu0
    %387 = vdwg.mxu0
    %v388 = vadd.f32 %v299, %v380
    %v389 = vadd.f32 %v304, %v385
    %391 = vset.pattern.permute.xlu0 0
    %392 = vperm.xlu0 %391, %v50
    %v393 = vpop.permute.xlu0 %392
    %396 = vset.pattern.permute.xlu0 0
    %397 = vperm.xlu0 %396, %v51
    %v398 = vpop.permute.xlu0 %397
    %v400 = vadd.f32 %v388, %v393
    %v401 = vadd.f32 %v389, %v398
    %402 = vadd.xlane.f32.xlu0 %v400
    %v403 = vpop.xlane.xlu0 %402
    %404 = vadd.xlane.f32.xlu0 %v401
    %v405 = vpop.xlane.xlu0 %404
    %v406 = vadd.f32 %v403, 0.0
    %v407 = vadd.f32 %v405, 0.0
    %s408 = scalar_lea.vmem %s0, 16
    %v409 = vld [vmem:[%s408] sm:$0xff]
    %v410 = vld [vmem:[%s408 + $0x8] sm:$0xff]
    %411 = vmatprep.subr.mxu0 0.0
    %412 = vmatpush1.msra.mxu0 %v409
    %413 = vmatprep.subr.mxu0 0.0
    %414 = vmatpush1.msra.mxu0 %v410
    %415 = vmatprep.subr.mxu0 0.0
    %416 = vmatpush1.msra.mxu0 0.0
    %417 = vmatprep.subr.mxu0 0.0
    %418 = vmatpush1.msra.mxu0 0.0
    %419 = vmatprep.subr.mxu0 0.0
    %420 = vmatpush1.msra.mxu0 0.0
    %421 = vmatprep.subr.mxu0 0.0
    %422 = vmatpush1.msra.mxu0 0.0
    %423 = vmatprep.subr.mxu0 0.0
    %424 = vmatpush1.msra.mxu0 0.0
    %425 = vmatprep.subr.mxu0 0.0
    %426 = vmatpush1.msra.mxu0 0.0
    %427 = vmatprep.subr.mxu0 0.0
    %428 = vmatpush1.msra.mxu0 0.0
    %429 = vmatprep.subr.mxu0 0.0
    %430 = vmatpush1.msra.mxu0 0.0
    %431 = vmatprep.subr.mxu0 0.0
    %432 = vmatpush1.msra.mxu0 0.0
    %433 = vmatprep.subr.mxu0 0.0
    %434 = vmatpush1.msra.mxu0 0.0
    %435 = vmatprep.subr.mxu0 0.0
    %436 = vmatpush1.msra.mxu0 0.0
    %437 = vmatprep.subr.mxu0 0.0
    %438 = vmatpush1.msra.mxu0 0.0
    %439 = vmatprep.subr.mxu0 0.0
    %440 = vmatpush1.msra.mxu0 0.0
    %441 = vmatprep.subr.mxu0 0.0
    %442 = vmatpush1.msra.mxu0 0.0
    %443 = vmatprep.subr.mxu0 0.0
    %444 = vmatpush1.msra.mxu0 0.0
    %445 = vmatprep.subr.mxu0 0.0
    %446 = vmatpush1.msra.mxu0 0.0
    %447 = vmatprep.subr.mxu0 0.0
    %448 = vmatpush1.msra.mxu0 0.0
    %449 = vmatprep.subr.mxu0 0.0
    %450 = vmatpush1.msra.mxu0 0.0
    %451 = vmatprep.subr.mxu0 0.0
    %452 = vmatpush1.msra.mxu0 0.0
    %453 = vmatprep.subr.mxu0 0.0
    %454 = vmatpush1.msra.mxu0 0.0
    %455 = vmatprep.subr.mxu0 0.0
    %456 = vmatpush1.msra.mxu0 0.0
    %457 = vmatprep.subr.mxu0 0.0
    %458 = vmatpush1.msra.mxu0 0.0
    %459 = vmatprep.subr.mxu0 0.0
    %460 = vmatpush1.msra.mxu0 0.0
    %461 = vmatprep.subr.mxu0 0.0
    %462 = vmatpush1.msra.mxu0 0.0
    %463 = vmatprep.subr.mxu0 0.0
    %464 = vmatpush1.msra.mxu0 0.0
    %465 = vmatprep.subr.mxu0 0.0
    %466 = vmatpush1.msra.mxu0 0.0
    %467 = vmatprep.subr.mxu0 0.0
    %468 = vmatpush1.msra.mxu0 0.0
    %469 = vmatprep.subr.mxu0 0.0
    %470 = vmatpush1.msra.mxu0 0.0
    %471 = vmatprep.subr.mxu0 0.0
    %472 = vmatpush1.msra.mxu0 0.0
    %473 = vmatprep.subr.mxu0 0.0
    %474 = vmatpush1.msra.mxu0 0.0
    %475 = vmatprep.mubr.f32.mxu0 0.0
    %476 = vmatmul.mubr.f32.gmra.mrb[0].mxu0 %v63
    %v477 = vpop.f32.mrb[0].mxu0
    %v478 = vadd.f32 %v59, %v477
    %v479 = vpop.f32.mrb[0].mxu0
    %480 = vdwg.mxu0
    %v481 = vmax.f32 %v478, 0.0
    %482 = vrot.lane.b32.xlu0 %v481, 1
    %v483 = vpop.permute.xlu0 %482
    %v484 = vsel %vm136, 0.0, %v483
    %485 = vrot.lane.b32.xlu0 %v481, 127
    %v486 = vpop.permute.xlu0 %485
    %v487 = vsel %vm140, 0.0, %v486
    %488 = vmatprep.subr.mxu0 0.0
    %489 = vmatpush1.msra.mxu0 %v481
    %490 = vmatprep.subr.mxu0 0.0
    %491 = vmatpush1.msra.mxu0 0.0
    %492 = vmatprep.subr.mxu0 0.0
    %493 = vmatpush1.msra.mxu0 0.0
    %494 = vmatprep.subr.mxu0 0.0
    %495 = vmatpush1.msra.mxu0 0.0
    %496 = vmatprep.subr.mxu0 0.0
    %497 = vmatpush1.msra.mxu0 0.0
    %498 = vmatprep.subr.mxu0 0.0
    %499 = vmatpush1.msra.mxu0 0.0
    %500 = vmatprep.subr.mxu0 0.0
    %501 = vmatpush1.msra.mxu0 0.0
    %502 = vmatprep.subr.mxu0 0.0
    %503 = vmatpush1.msra.mxu0 0.0
    %504 = vmatprep.subr.mxu0 0.0
    %505 = vmatpush1.msra.mxu0 0.0
    %506 = vmatprep.subr.mxu0 0.0
    %507 = vmatpush1.msra.mxu0 0.0
    %508 = vmatprep.subr.mxu0 0.0
    %509 = vmatpush1.msra.mxu0 0.0
    %510 = vmatprep.subr.mxu0 0.0
    %511 = vmatpush1.msra.mxu0 0.0
    %512 = vmatprep.subr.mxu0 0.0
    %513 = vmatpush1.msra.mxu0 0.0
    %514 = vmatprep.subr.mxu0 0.0
    %515 = vmatpush1.msra.mxu0 0.0
    %516 = vmatprep.subr.mxu0 0.0
    %517 = vmatpush1.msra.mxu0 0.0
    %518 = vmatprep.subr.mxu0 0.0
    %519 = vmatpush1.msra.mxu0 0.0
    %520 = vmatprep.subr.mxu0 0.0
    %521 = vmatpush1.msra.mxu0 0.0
    %522 = vmatprep.subr.mxu0 0.0
    %523 = vmatpush1.msra.mxu0 0.0
    %524 = vmatprep.subr.mxu0 0.0
    %525 = vmatpush1.msra.mxu0 0.0
    %526 = vmatprep.subr.mxu0 0.0
    %527 = vmatpush1.msra.mxu0 0.0
    %528 = vmatprep.subr.mxu0 0.0
    %529 = vmatpush1.msra.mxu0 0.0
    %530 = vmatprep.subr.mxu0 0.0
    %531 = vmatpush1.msra.mxu0 0.0
    %532 = vmatprep.subr.mxu0 0.0
    %533 = vmatpush1.msra.mxu0 0.0
    %534 = vmatprep.subr.mxu0 0.0
    %535 = vmatpush1.msra.mxu0 0.0
    %536 = vmatprep.subr.mxu0 0.0
    %537 = vmatpush1.msra.mxu0 0.0
    %538 = vmatprep.subr.mxu0 0.0
    %539 = vmatpush1.msra.mxu0 0.0
    %540 = vmatprep.subr.mxu0 0.0
    %541 = vmatpush1.msra.mxu0 0.0
    %542 = vmatprep.subr.mxu0 0.0
    %543 = vmatpush1.msra.mxu0 0.0
    %544 = vmatprep.subr.mxu0 0.0
    %545 = vmatpush1.msra.mxu0 0.0
    %546 = vmatprep.subr.mxu0 0.0
    %547 = vmatpush1.msra.mxu0 0.0
    %548 = vmatprep.subr.mxu0 0.0
    %549 = vmatpush1.msra.mxu0 0.0
    %550 = vmatprep.subr.mxu0 0.0
    %551 = vmatpush1.msra.mxu0 0.0
    %552 = vmatprep.mubr.f32.mxu0 0.0
    %553 = vmatmul.mubr.f32.gmra.mrb[0].mxu0 %v146
    %v554 = vpop.f32.mrb[0].mxu0
    %v555 = vadd.f32 0.0, %v554
    %v556 = vpop.f32.mrb[0].mxu0
    %557 = vmatprep.mubr.f32.mxu0 0.0
    %558 = vmatmul.mubr.f32.gmra.mrb[0].mxu0 %v149
    %v559 = vpop.f32.mrb[0].mxu0
    %v560 = vadd.f32 0.0, %v559
    %v561 = vpop.f32.mrb[0].mxu0
    %562 = vdwg.mxu0
    %563 = vmatprep.subr.mxu0 0.0
    %564 = vmatpush1.msra.mxu0 %v484
    %565 = vmatprep.subr.mxu0 0.0
    %566 = vmatpush1.msra.mxu0 0.0
    %567 = vmatprep.subr.mxu0 0.0
    %568 = vmatpush1.msra.mxu0 0.0
    %569 = vmatprep.subr.mxu0 0.0
    %570 = vmatpush1.msra.mxu0 0.0
    %571 = vmatprep.subr.mxu0 0.0
    %572 = vmatpush1.msra.mxu0 0.0
    %573 = vmatprep.subr.mxu0 0.0
    %574 = vmatpush1.msra.mxu0 0.0
    %575 = vmatprep.subr.mxu0 0.0
    %576 = vmatpush1.msra.mxu0 0.0
    %577 = vmatprep.subr.mxu0 0.0
    %578 = vmatpush1.msra.mxu0 0.0
    %579 = vmatprep.subr.mxu0 0.0
    %580 = vmatpush1.msra.mxu0 0.0
    %581 = vmatprep.subr.mxu0 0.0
    %582 = vmatpush1.msra.mxu0 0.0
    %583 = vmatprep.subr.mxu0 0.0
    %584 = vmatpush1.msra.mxu0 0.0
    %585 = vmatprep.subr.mxu0 0.0
    %586 = vmatpush1.msra.mxu0 0.0
    %587 = vmatprep.subr.mxu0 0.0
    %588 = vmatpush1.msra.mxu0 0.0
    %589 = vmatprep.subr.mxu0 0.0
    %590 = vmatpush1.msra.mxu0 0.0
    %591 = vmatprep.subr.mxu0 0.0
    %592 = vmatpush1.msra.mxu0 0.0
    %593 = vmatprep.subr.mxu0 0.0
    %594 = vmatpush1.msra.mxu0 0.0
    %595 = vmatprep.subr.mxu0 0.0
    %596 = vmatpush1.msra.mxu0 0.0
    %597 = vmatprep.subr.mxu0 0.0
    %598 = vmatpush1.msra.mxu0 0.0
    %599 = vmatprep.subr.mxu0 0.0
    %600 = vmatpush1.msra.mxu0 0.0
    %601 = vmatprep.subr.mxu0 0.0
    %602 = vmatpush1.msra.mxu0 0.0
    %603 = vmatprep.subr.mxu0 0.0
    %604 = vmatpush1.msra.mxu0 0.0
    %605 = vmatprep.subr.mxu0 0.0
    %606 = vmatpush1.msra.mxu0 0.0
    %607 = vmatprep.subr.mxu0 0.0
    %608 = vmatpush1.msra.mxu0 0.0
    %609 = vmatprep.subr.mxu0 0.0
    %610 = vmatpush1.msra.mxu0 0.0
    %611 = vmatprep.subr.mxu0 0.0
    %612 = vmatpush1.msra.mxu0 0.0
    %613 = vmatprep.subr.mxu0 0.0
    %614 = vmatpush1.msra.mxu0 0.0
    %615 = vmatprep.subr.mxu0 0.0
    %616 = vmatpush1.msra.mxu0 0.0
    %617 = vmatprep.subr.mxu0 0.0
    %618 = vmatpush1.msra.mxu0 0.0
    %619 = vmatprep.subr.mxu0 0.0
    %620 = vmatpush1.msra.mxu0 0.0
    %621 = vmatprep.subr.mxu0 0.0
    %622 = vmatpush1.msra.mxu0 0.0
    %623 = vmatprep.subr.mxu0 0.0
    %624 = vmatpush1.msra.mxu0 0.0
    %625 = vmatprep.subr.mxu0 0.0
    %626 = vmatpush1.msra.mxu0 0.0
    %627 = vmatprep.mubr.f32.mxu0 0.0
    %628 = vmatmul.mubr.f32.gmra.mrb[0].mxu0 %v227
    %v629 = vpop.f32.mrb[0].mxu0
    %v630 = vadd.f32 %v555, %v629
    %v631 = vpop.f32.mrb[0].mxu0
    %632 = vmatprep.mubr.f32.mxu0 0.0
    %633 = vmatmul.mubr.f32.gmra.mrb[0].mxu0 %v230
    %v634 = vpop.f32.mrb[0].mxu0
    %v635 = vadd.f32 %v560, %v634
    %v636 = vpop.f32.mrb[0].mxu0
    %637 = vdwg.mxu0
    %638 = vmatprep.subr.mxu0 0.0
    %639 = vmatpush1.msra.mxu0 %v487
    %640 = vmatprep.subr.mxu0 0.0
    %641 = vmatpush1.msra.mxu0 0.0
    %642 = vmatprep.subr.mxu0 0.0
    %643 = vmatpush1.msra.mxu0 0.0
    %644 = vmatprep.subr.mxu0 0.0
    %645 = vmatpush1.msra.mxu0 0.0
    %646 = vmatprep.subr.mxu0 0.0
    %647 = vmatpush1.msra.mxu0 0.0
    %648 = vmatprep.subr.mxu0 0.0
    %649 = vmatpush1.msra.mxu0 0.0
    %650 = vmatprep.subr.mxu0 0.0
    %651 = vmatpush1.msra.mxu0 0.0
    %652 = vmatprep.subr.mxu0 0.0
    %653 = vmatpush1.msra.mxu0 0.0
    %654 = vmatprep.subr.mxu0 0.0
    %655 = vmatpush1.msra.mxu0 0.0
    %656 = vmatprep.subr.mxu0 0.0
    %657 = vmatpush1.msra.mxu0 0.0
    %658 = vmatprep.subr.mxu0 0.0
    %659 = vmatpush1.msra.mxu0 0.0
    %660 = vmatprep.subr.mxu0 0.0
    %661 = vmatpush1.msra.mxu0 0.0
    %662 = vmatprep.subr.mxu0 0.0
    %663 = vmatpush1.msra.mxu0 0.0
    %664 = vmatprep.subr.mxu0 0.0
    %665 = vmatpush1.msra.mxu0 0.0
    %666 = vmatprep.subr.mxu0 0.0
    %667 = vmatpush1.msra.mxu0 0.0
    %668 = vmatprep.subr.mxu0 0.0
    %669 = vmatpush1.msra.mxu0 0.0
    %670 = vmatprep.subr.mxu0 0.0
    %671 = vmatpush1.msra.mxu0 0.0
    %672 = vmatprep.subr.mxu0 0.0
    %673 = vmatpush1.msra.mxu0 0.0
    %674 = vmatprep.subr.mxu0 0.0
    %675 = vmatpush1.msra.mxu0 0.0
    %676 = vmatprep.subr.mxu0 0.0
    %677 = vmatpush1.msra.mxu0 0.0
    %678 = vmatprep.subr.mxu0 0.0
    %679 = vmatpush1.msra.mxu0 0.0
    %680 = vmatprep.subr.mxu0 0.0
    %681 = vmatpush1.msra.mxu0 0.0
    %682 = vmatprep.subr.mxu0 0.0
    %683 = vmatpush1.msra.mxu0 0.0
    %684 = vmatprep.subr.mxu0 0.0
    %685 = vmatpush1.msra.mxu0 0.0
    %686 = vmatprep.subr.mxu0 0.0
    %687 = vmatpush1.msra.mxu0 0.0
    %688 = vmatprep.subr.mxu0 0.0
    %689 = vmatpush1.msra.mxu0 0.0
    %690 = vmatprep.subr.mxu0 0.0
    %691 = vmatpush1.msra.mxu0 0.0
    %692 = vmatprep.subr.mxu0 0.0
    %693 = vmatpush1.msra.mxu0 0.0
    %694 = vmatprep.subr.mxu0 0.0
    %695 = vmatpush1.msra.mxu0 0.0
    %696 = vmatprep.subr.mxu0 0.0
    %697 = vmatpush1.msra.mxu0 0.0
    %698 = vmatprep.subr.mxu0 0.0
    %699 = vmatpush1.msra.mxu0 0.0
    %700 = vmatprep.subr.mxu0 0.0
    %701 = vmatpush1.msra.mxu0 0.0
    %702 = vmatprep.mubr.f32.mxu0 0.0
    %703 = vmatmul.mubr.f32.gmra.mrb[0].mxu0 %v308
    %v704 = vpop.f32.mrb[0].mxu0
    %v705 = vadd.f32 0.0, %v704
    %v706 = vpop.f32.mrb[0].mxu0
    %707 = vmatprep.mubr.f32.mxu0 0.0
    %708 = vmatmul.mubr.f32.gmra.mrb[0].mxu0 %v311
    %v709 = vpop.f32.mrb[0].mxu0
    %v710 = vadd.f32 0.0, %v709
    %v711 = vpop.f32.mrb[0].mxu0
    %712 = vdwg.mxu0
    %v713 = vadd.f32 %v630, %v705
    %v714 = vadd.f32 %v635, %v710
    %v715 = vadd.f32 %v713, %v393
    %v716 = vadd.f32 %v714, %v398
    %717 = vadd.xlane.f32.xlu0 %v715
    %v718 = vpop.xlane.xlu0 %717
    %719 = vadd.xlane.f32.xlu0 %v716
    %v720 = vpop.xlane.xlu0 %719
    %v721 = vadd.f32 %v406, %v718
    %v722 = vadd.f32 %v407, %v720
    %v723 = vrcp.pop 256.0
    %v724 = vmul.f32 %v721, %v723
    %v725 = vmul.f32 %v722, %v723
    %v726 = vsub.f32 %v400, %v724
    %v727 = vsub.f32 %v401, %v725
    %v728 = vmul.f32 %v726, %v726
    %v729 = vmul.f32 %v727, %v727
    %730 = vadd.xlane.f32.xlu0 %v728
    %v731 = vpop.xlane.xlu0 %730
    %732 = vadd.xlane.f32.xlu0 %v729
    %v733 = vpop.xlane.xlu0 %732
    %v734 = vadd.f32 %v731, 0.0
    %v735 = vadd.f32 %v733, 0.0
    %v736 = vsub.f32 %v715, %v724
    %v737 = vsub.f32 %v716, %v725
    %v738 = vmul.f32 %v736, %v736
    %v739 = vmul.f32 %v737, %v737
    %740 = vadd.xlane.f32.xlu0 %v738
    %v741 = vpop.xlane.xlu0 %740
    %742 = vadd.xlane.f32.xlu0 %v739
    %v743 = vpop.xlane.xlu0 %742
    %v744 = vadd.f32 %v734, %v741
    %v745 = vadd.f32 %v735, %v743
    %v746 = vmul.f32 %v744, %v723
    %v747 = vmul.f32 %v745, %v723
    %v748 = vadd.f32 %v746, 1e-05
    %v749 = vadd.f32 %v747, 1e-05
    %v750 = vrsqrt.pop %v748
    %v751 = vrsqrt.pop %v749
    %v752 = vld [vmem:[%s7] sm:$0xff]
    %v753 = vld [vmem:[%s7 + $0x8] sm:$0xff]
    %v754 = vmul.f32 %v752, %v750
    %v755 = vmul.f32 %v753, %v751
    %v756 = vld [vmem:[%s8] sm:$0xff]
    %v757 = vld [vmem:[%s8 + $0x8] sm:$0xff]
    %v758 = vmul.f32 %v724, %v754
    %v759 = vmul.f32 %v725, %v755
    %v760 = vsub.f32 %v756, %v758
    %v761 = vsub.f32 %v757, %v759
    %v762 = vlaneseq
    %v763 = vshrl.u32 %v762, 7
    %v764 = vadd.s32 %v763, 8
    %v765 = vadd.s32 %v763, 16
    %v766 = vadd.s32 %v763, 24
    %v767 = vadd.s32 %v763, 32
    %v768 = vadd.s32 %v763, 40
    %v769 = vadd.s32 %v763, 48
    %v770 = vadd.s32 %v763, 56
    %v771 = vadd.s32 %v763, 64
    %v772 = vadd.s32 %v763, 72
    %v773 = vadd.s32 %v763, 80
    %v774 = vadd.s32 %v763, 88
    %v775 = vadd.s32 %v763, 96
    %v776 = vadd.s32 %v763, 104
    %v777 = vadd.s32 %v763, 112
    %v778 = vadd.s32 %v763, 120
    %v779 = vadd.s32 %v53, 128
    %v780 = vmul.u32 %v763, 2
    %v781 = vmul.u32 %v764, 2
    %v782 = vmul.u32 %v765, 2
    %v783 = vmul.u32 %v766, 2
    %v784 = vmul.u32 %v767, 2
    %v785 = vmul.u32 %v768, 2
    %v786 = vmul.u32 %v769, 2
    %v787 = vmul.u32 %v770, 2
    %v788 = vmul.u32 %v771, 2
    %v789 = vmul.u32 %v772, 2
    %v790 = vmul.u32 %v773, 2
    %v791 = vmul.u32 %v774, 2
    %v792 = vmul.u32 %v775, 2
    %v793 = vmul.u32 %v776, 2
    %v794 = vmul.u32 %v777, 2
    %v795 = vmul.u32 %v778, 2
    %vm796 = vcmp.eq.s32.totalorder %v53, %v780
    %vm797 = vcmp.eq.s32.totalorder %v779, %v780
    %vm798 = vcmp.eq.s32.totalorder %v53, %v781
    %vm799 = vcmp.eq.s32.totalorder %v779, %v781
    %vm800 = vcmp.eq.s32.totalorder %v53, %v782
    %vm801 = vcmp.eq.s32.totalorder %v779, %v782
    %vm802 = vcmp.eq.s32.totalorder %v53, %v783
    %vm803 = vcmp.eq.s32.totalorder %v779, %v783
    %vm804 = vcmp.eq.s32.totalorder %v53, %v784
    %vm805 = vcmp.eq.s32.totalorder %v779, %v784
    %vm806 = vcmp.eq.s32.totalorder %v53, %v785
    %vm807 = vcmp.eq.s32.totalorder %v779, %v785
    %vm808 = vcmp.eq.s32.totalorder %v53, %v786
    %vm809 = vcmp.eq.s32.totalorder %v779, %v786
    %vm810 = vcmp.eq.s32.totalorder %v53, %v787
    %vm811 = vcmp.eq.s32.totalorder %v779, %v787
    %vm812 = vcmp.eq.s32.totalorder %v53, %v788
    %vm813 = vcmp.eq.s32.totalorder %v779, %v788
    %vm814 = vcmp.eq.s32.totalorder %v53, %v789
    %vm815 = vcmp.eq.s32.totalorder %v779, %v789
    %vm816 = vcmp.eq.s32.totalorder %v53, %v790
    %vm817 = vcmp.eq.s32.totalorder %v779, %v790
    %vm818 = vcmp.eq.s32.totalorder %v53, %v791
    %vm819 = vcmp.eq.s32.totalorder %v779, %v791
    %vm820 = vcmp.eq.s32.totalorder %v53, %v792
    %vm821 = vcmp.eq.s32.totalorder %v779, %v792
    %vm822 = vcmp.eq.s32.totalorder %v53, %v793
    %vm823 = vcmp.eq.s32.totalorder %v779, %v793
    %vm824 = vcmp.eq.s32.totalorder %v53, %v794
    %vm825 = vcmp.eq.s32.totalorder %v779, %v794
    %vm826 = vcmp.eq.s32.totalorder %v53, %v795
    %vm827 = vcmp.eq.s32.totalorder %v779, %v795
    %v828 = vsel %vm796, 1, 0
    %v829 = vsel %vm797, 1, 0
    %v830 = vsel %vm798, 1, 0
    %v831 = vsel %vm799, 1, 0
    %v832 = vsel %vm800, 1, 0
    %v833 = vsel %vm801, 1, 0
    %v834 = vsel %vm802, 1, 0
    %v835 = vsel %vm803, 1, 0
    %v836 = vsel %vm804, 1, 0
    %v837 = vsel %vm805, 1, 0
    %v838 = vsel %vm806, 1, 0
    %v839 = vsel %vm807, 1, 0
    %v840 = vsel %vm808, 1, 0
    %v841 = vsel %vm809, 1, 0
    %v842 = vsel %vm810, 1, 0
    %v843 = vsel %vm811, 1, 0
    %v844 = vsel %vm812, 1, 0
    %v845 = vsel %vm813, 1, 0
    %v846 = vsel %vm814, 1, 0
    %v847 = vsel %vm815, 1, 0
    %v848 = vsel %vm816, 1, 0
    %v849 = vsel %vm817, 1, 0
    %v850 = vsel %vm818, 1, 0
    %v851 = vsel %vm819, 1, 0
    %v852 = vsel %vm820, 1, 0
    %v853 = vsel %vm821, 1, 0
    %v854 = vsel %vm822, 1, 0
    %v855 = vsel %vm823, 1, 0
    %v856 = vsel %vm824, 1, 0
    %v857 = vsel %vm825, 1, 0
    %v858 = vsel %vm826, 1, 0
    %v859 = vsel %vm827, 1, 0
    %v860 = vcvt.s32.f32 %v828
    %v861 = vcvt.s32.f32 %v829
    %v862 = vcvt.s32.f32 %v830
    %v863 = vcvt.s32.f32 %v831
    %v864 = vcvt.s32.f32 %v832
    %v865 = vcvt.s32.f32 %v833
    %v866 = vcvt.s32.f32 %v834
    %v867 = vcvt.s32.f32 %v835
    %v868 = vcvt.s32.f32 %v836
    %v869 = vcvt.s32.f32 %v837
    %v870 = vcvt.s32.f32 %v838
    %v871 = vcvt.s32.f32 %v839
    %v872 = vcvt.s32.f32 %v840
    %v873 = vcvt.s32.f32 %v841
    %v874 = vcvt.s32.f32 %v842
    %v875 = vcvt.s32.f32 %v843
    %v876 = vcvt.s32.f32 %v844
    %v877 = vcvt.s32.f32 %v845
    %v878 = vcvt.s32.f32 %v846
    %v879 = vcvt.s32.f32 %v847
    %v880 = vcvt.s32.f32 %v848
    %v881 = vcvt.s32.f32 %v849
    %v882 = vcvt.s32.f32 %v850
    %v883 = vcvt.s32.f32 %v851
    %v884 = vcvt.s32.f32 %v852
    %v885 = vcvt.s32.f32 %v853
    %v886 = vcvt.s32.f32 %v854
    %v887 = vcvt.s32.f32 %v855
    %v888 = vcvt.s32.f32 %v856
    %v889 = vcvt.s32.f32 %v857
    %v890 = vcvt.s32.f32 %v858
    %v891 = vcvt.s32.f32 %v859
    %v892 = vadd.s32 %v780, 1
    %v893 = vadd.s32 %v781, 1
    %v894 = vadd.s32 %v782, 1
    %v895 = vadd.s32 %v783, 1
    %v896 = vadd.s32 %v784, 1
    %v897 = vadd.s32 %v785, 1
    %v898 = vadd.s32 %v786, 1
    %v899 = vadd.s32 %v787, 1
    %v900 = vadd.s32 %v788, 1
    %v901 = vadd.s32 %v789, 1
    %v902 = vadd.s32 %v790, 1
    %v903 = vadd.s32 %v791, 1
    %v904 = vadd.s32 %v792, 1
    %v905 = vadd.s32 %v793, 1
    %v906 = vadd.s32 %v794, 1
    %v907 = vadd.s32 %v795, 1
    %vm908 = vcmp.eq.s32.totalorder %v53, %v892
    %vm909 = vcmp.eq.s32.totalorder %v779, %v892
    %vm910 = vcmp.eq.s32.totalorder %v53, %v893
    %vm911 = vcmp.eq.s32.totalorder %v779, %v893
    %vm912 = vcmp.eq.s32.totalorder %v53, %v894
    %vm913 = vcmp.eq.s32.totalorder %v779, %v894
    %vm914 = vcmp.eq.s32.totalorder %v53, %v895
    %vm915 = vcmp.eq.s32.totalorder %v779, %v895
    %vm916 = vcmp.eq.s32.totalorder %v53, %v896
    %vm917 = vcmp.eq.s32.totalorder %v779, %v896
    %vm918 = vcmp.eq.s32.totalorder %v53, %v897
    %vm919 = vcmp.eq.s32.totalorder %v779, %v897
    %vm920 = vcmp.eq.s32.totalorder %v53, %v898
    %vm921 = vcmp.eq.s32.totalorder %v779, %v898
    %vm922 = vcmp.eq.s32.totalorder %v53, %v899
    %vm923 = vcmp.eq.s32.totalorder %v779, %v899
    %vm924 = vcmp.eq.s32.totalorder %v53, %v900
    %vm925 = vcmp.eq.s32.totalorder %v779, %v900
    %vm926 = vcmp.eq.s32.totalorder %v53, %v901
    %vm927 = vcmp.eq.s32.totalorder %v779, %v901
    %vm928 = vcmp.eq.s32.totalorder %v53, %v902
    %vm929 = vcmp.eq.s32.totalorder %v779, %v902
    %vm930 = vcmp.eq.s32.totalorder %v53, %v903
    %vm931 = vcmp.eq.s32.totalorder %v779, %v903
    %vm932 = vcmp.eq.s32.totalorder %v53, %v904
    %vm933 = vcmp.eq.s32.totalorder %v779, %v904
    %vm934 = vcmp.eq.s32.totalorder %v53, %v905
    %vm935 = vcmp.eq.s32.totalorder %v779, %v905
    %vm936 = vcmp.eq.s32.totalorder %v53, %v906
    %vm937 = vcmp.eq.s32.totalorder %v779, %v906
    %vm938 = vcmp.eq.s32.totalorder %v53, %v907
    %vm939 = vcmp.eq.s32.totalorder %v779, %v907
    %v940 = vsel %vm908, 1, 0
    %v941 = vsel %vm909, 1, 0
    %v942 = vsel %vm910, 1, 0
    %v943 = vsel %vm911, 1, 0
    %v944 = vsel %vm912, 1, 0
    %v945 = vsel %vm913, 1, 0
    %v946 = vsel %vm914, 1, 0
    %v947 = vsel %vm915, 1, 0
    %v948 = vsel %vm916, 1, 0
    %v949 = vsel %vm917, 1, 0
    %v950 = vsel %vm918, 1, 0
    %v951 = vsel %vm919, 1, 0
    %v952 = vsel %vm920, 1, 0
    %v953 = vsel %vm921, 1, 0
    %v954 = vsel %vm922, 1, 0
    %v955 = vsel %vm923, 1, 0
    %v956 = vsel %vm924, 1, 0
    %v957 = vsel %vm925, 1, 0
    %v958 = vsel %vm926, 1, 0
    %v959 = vsel %vm927, 1, 0
    %v960 = vsel %vm928, 1, 0
    %v961 = vsel %vm929, 1, 0
    %v962 = vsel %vm930, 1, 0
    %v963 = vsel %vm931, 1, 0
    %v964 = vsel %vm932, 1, 0
    %v965 = vsel %vm933, 1, 0
    %v966 = vsel %vm934, 1, 0
    %v967 = vsel %vm935, 1, 0
    %v968 = vsel %vm936, 1, 0
    %v969 = vsel %vm937, 1, 0
    %v970 = vsel %vm938, 1, 0
    %v971 = vsel %vm939, 1, 0
    %v972 = vcvt.s32.f32 %v940
    %v973 = vcvt.s32.f32 %v941
    %v974 = vcvt.s32.f32 %v942
    %v975 = vcvt.s32.f32 %v943
    %v976 = vcvt.s32.f32 %v944
    %v977 = vcvt.s32.f32 %v945
    %v978 = vcvt.s32.f32 %v946
    %v979 = vcvt.s32.f32 %v947
    %v980 = vcvt.s32.f32 %v948
    %v981 = vcvt.s32.f32 %v949
    %v982 = vcvt.s32.f32 %v950
    %v983 = vcvt.s32.f32 %v951
    %v984 = vcvt.s32.f32 %v952
    %v985 = vcvt.s32.f32 %v953
    %v986 = vcvt.s32.f32 %v954
    %v987 = vcvt.s32.f32 %v955
    %v988 = vcvt.s32.f32 %v956
    %v989 = vcvt.s32.f32 %v957
    %v990 = vcvt.s32.f32 %v958
    %v991 = vcvt.s32.f32 %v959
    %v992 = vcvt.s32.f32 %v960
    %v993 = vcvt.s32.f32 %v961
    %v994 = vcvt.s32.f32 %v962
    %v995 = vcvt.s32.f32 %v963
    %v996 = vcvt.s32.f32 %v964
    %v997 = vcvt.s32.f32 %v965
    %v998 = vcvt.s32.f32 %v966
    %v999 = vcvt.s32.f32 %v967
    %v1000 = vcvt.s32.f32 %v968
    %v1001 = vcvt.s32.f32 %v969
    %v1002 = vcvt.s32.f32 %v970
    %v1003 = vcvt.s32.f32 %v971
    %v1004 = vld [vmem:[%s9] sm:$0xff]
    %v1005 = vld [vmem:[%s9 + $0x8] sm:$0xff]
    %v1006 = vld [vmem:[%s10] sm:$0xff]
    %v1007 = vld [vmem:[%s10 + $0x8] sm:$0xff]
    %v1008 = vld [vmem:[%s11] sm:$0xff]
    %v1009 = vld [vmem:[%s11 + $0x8] sm:$0xff]
    %1011 = vset.pattern.permute.xlu0 0
    %1012 = vperm.xlu0 %1011, %v754
    %v1013 = vpop.permute.xlu0 %1012
    %1016 = vset.pattern.permute.xlu0 0
    %1017 = vperm.xlu0 %1016, %v755
    %v1018 = vpop.permute.xlu0 %1017
    %v1020 = vmul.f32 %v400, %v1013
    %v1021 = vmul.f32 %v401, %v1018
    %1023 = vset.pattern.permute.xlu0 0
    %1024 = vperm.xlu0 %1023, %v760
    %v1025 = vpop.permute.xlu0 %1024
    %1028 = vset.pattern.permute.xlu0 0
    %1029 = vperm.xlu0 %1028, %v761
    %v1030 = vpop.permute.xlu0 %1029
    %v1032 = vadd.f32 %v1020, %v1025
    %v1033 = vadd.f32 %v1021, %v1030
    %v1034 = vmax.f32 %v1032, 0.0
    %v1035 = vmax.f32 %v1033, 0.0
    %v1037 = vsel %vm61, %v1004, 0
    %v1040 = vsel %vm61, %v1005, 0
    %1042 = vmatprep.subr.mxu0 0.0
    %1043 = vmatpush1.msra.mxu0 %v1034
    %1044 = vmatprep.subr.mxu0 0.0
    %1045 = vmatpush1.msra.mxu0 %v1035
    %1046 = vmatprep.subr.mxu0 0.0
    %1047 = vmatpush1.msra.mxu0 0.0
    %1048 = vmatprep.subr.mxu0 0.0
    %1049 = vmatpush1.msra.mxu0 0.0
    %1050 = vmatprep.subr.mxu0 0.0
    %1051 = vmatpush1.msra.mxu0 0.0
    %1052 = vmatprep.subr.mxu0 0.0
    %1053 = vmatpush1.msra.mxu0 0.0
    %1054 = vmatprep.subr.mxu0 0.0
    %1055 = vmatpush1.msra.mxu0 0.0
    %1056 = vmatprep.subr.mxu0 0.0
    %1057 = vmatpush1.msra.mxu0 0.0
    %1058 = vmatprep.subr.mxu0 0.0
    %1059 = vmatpush1.msra.mxu0 0.0
    %1060 = vmatprep.subr.mxu0 0.0
    %1061 = vmatpush1.msra.mxu0 0.0
    %1062 = vmatprep.subr.mxu0 0.0
    %1063 = vmatpush1.msra.mxu0 0.0
    %1064 = vmatprep.subr.mxu0 0.0
    %1065 = vmatpush1.msra.mxu0 0.0
    %1066 = vmatprep.subr.mxu0 0.0
    %1067 = vmatpush1.msra.mxu0 0.0
    %1068 = vmatprep.subr.mxu0 0.0
    %1069 = vmatpush1.msra.mxu0 0.0
    %1070 = vmatprep.subr.mxu0 0.0
    %1071 = vmatpush1.msra.mxu0 0.0
    %1072 = vmatprep.subr.mxu0 0.0
    %1073 = vmatpush1.msra.mxu0 0.0
    %1074 = vmatprep.subr.mxu0 0.0
    %1075 = vmatpush1.msra.mxu0 0.0
    %1076 = vmatprep.subr.mxu0 0.0
    %1077 = vmatpush1.msra.mxu0 0.0
    %1078 = vmatprep.subr.mxu0 0.0
    %1079 = vmatpush1.msra.mxu0 0.0
    %1080 = vmatprep.subr.mxu0 0.0
    %1081 = vmatpush1.msra.mxu0 0.0
    %1082 = vmatprep.subr.mxu0 0.0
    %1083 = vmatpush1.msra.mxu0 0.0
    %1084 = vmatprep.subr.mxu0 0.0
    %1085 = vmatpush1.msra.mxu0 0.0
    %1086 = vmatprep.subr.mxu0 0.0
    %1087 = vmatpush1.msra.mxu0 0.0
    %1088 = vmatprep.subr.mxu0 0.0
    %1089 = vmatpush1.msra.mxu0 0.0
    %1090 = vmatprep.subr.mxu0 0.0
    %1091 = vmatpush1.msra.mxu0 0.0
    %1092 = vmatprep.subr.mxu0 0.0
    %1093 = vmatpush1.msra.mxu0 0.0
    %1094 = vmatprep.subr.mxu0 0.0
    %1095 = vmatpush1.msra.mxu0 0.0
    %1096 = vmatprep.subr.mxu0 0.0
    %1097 = vmatpush1.msra.mxu0 0.0
    %1098 = vmatprep.subr.mxu0 0.0
    %1099 = vmatpush1.msra.mxu0 0.0
    %1100 = vmatprep.subr.mxu0 0.0
    %1101 = vmatpush1.msra.mxu0 0.0
    %1102 = vmatprep.subr.mxu0 0.0
    %1103 = vmatpush1.msra.mxu0 0.0
    %1104 = vmatprep.subr.mxu0 0.0
    %1105 = vmatpush1.msra.mxu0 0.0
    %1106 = vmatprep.mubr.f32.mxu0 0.0
    %1107 = vmatmul.mubr.f32.gmra.mrb[0].mxu0 %v1037
    %v1108 = vpop.f32.mrb[0].mxu0
    %v1109 = vadd.f32 0.0, %v1108
    %v1110 = vpop.f32.mrb[0].mxu0
    %1111 = vmatprep.mubr.f32.mxu0 0.0
    %1112 = vmatmul.mubr.f32.gmra.mrb[0].mxu0 %v1040
    %v1113 = vpop.f32.mrb[0].mxu0
    %v1114 = vadd.f32 0.0, %v1113
    %v1115 = vpop.f32.mrb[0].mxu0
    %1116 = vdwg.mxu0
    %v1118 = vsel %vm61, %v1006, 0
    %v1121 = vsel %vm61, %v1007, 0
    %1123 = vmatprep.subr.mxu0 0.0
    %1124 = vmatpush1.msra.mxu0 %v1034
    %1125 = vmatprep.subr.mxu0 0.0
    %1126 = vmatpush1.msra.mxu0 %v1035
    %1127 = vmatprep.subr.mxu0 0.0
    %1128 = vmatpush1.msra.mxu0 0.0
    %1129 = vmatprep.subr.mxu0 0.0
    %1130 = vmatpush1.msra.mxu0 0.0
    %1131 = vmatprep.subr.mxu0 0.0
    %1132 = vmatpush1.msra.mxu0 0.0
    %1133 = vmatprep.subr.mxu0 0.0
    %1134 = vmatpush1.msra.mxu0 0.0
    %1135 = vmatprep.subr.mxu0 0.0
    %1136 = vmatpush1.msra.mxu0 0.0
    %1137 = vmatprep.subr.mxu0 0.0
    %1138 = vmatpush1.msra.mxu0 0.0
    %1139 = vmatprep.subr.mxu0 0.0
    %1140 = vmatpush1.msra.mxu0 0.0
    %1141 = vmatprep.subr.mxu0 0.0
    %1142 = vmatpush1.msra.mxu0 0.0
    %1143 = vmatprep.subr.mxu0 0.0
    %1144 = vmatpush1.msra.mxu0 0.0
    %1145 = vmatprep.subr.mxu0 0.0
    %1146 = vmatpush1.msra.mxu0 0.0
    %1147 = vmatprep.subr.mxu0 0.0
    %1148 = vmatpush1.msra.mxu0 0.0
    %1149 = vmatprep.subr.mxu0 0.0
    %1150 = vmatpush1.msra.mxu0 0.0
    %1151 = vmatprep.subr.mxu0 0.0
    %1152 = vmatpush1.msra.mxu0 0.0
    %1153 = vmatprep.subr.mxu0 0.0
    %1154 = vmatpush1.msra.mxu0 0.0
    %1155 = vmatprep.subr.mxu0 0.0
    %1156 = vmatpush1.msra.mxu0 0.0
    %1157 = vmatprep.subr.mxu0 0.0
    %1158 = vmatpush1.msra.mxu0 0.0
    %1159 = vmatprep.subr.mxu0 0.0
    %1160 = vmatpush1.msra.mxu0 0.0
    %1161 = vmatprep.subr.mxu0 0.0
    %1162 = vmatpush1.msra.mxu0 0.0
    %1163 = vmatprep.subr.mxu0 0.0
    %1164 = vmatpush1.msra.mxu0 0.0
    %1165 = vmatprep.subr.mxu0 0.0
    %1166 = vmatpush1.msra.mxu0 0.0
    %1167 = vmatprep.subr.mxu0 0.0
    %1168 = vmatpush1.msra.mxu0 0.0
    %1169 = vmatprep.subr.mxu0 0.0
    %1170 = vmatpush1.msra.mxu0 0.0
    %1171 = vmatprep.subr.mxu0 0.0
    %1172 = vmatpush1.msra.mxu0 0.0
    %1173 = vmatprep.subr.mxu0 0.0
    %1174 = vmatpush1.msra.mxu0 0.0
    %1175 = vmatprep.subr.mxu0 0.0
    %1176 = vmatpush1.msra.mxu0 0.0
    %1177 = vmatprep.subr.mxu0 0.0
    %1178 = vmatpush1.msra.mxu0 0.0
    %1179 = vmatprep.subr.mxu0 0.0
    %1180 = vmatpush1.msra.mxu0 0.0
    %1181 = vmatprep.subr.mxu0 0.0
    %1182 = vmatpush1.msra.mxu0 0.0
    %1183 = vmatprep.subr.mxu0 0.0
    %1184 = vmatpush1.msra.mxu0 0.0
    %1185 = vmatprep.subr.mxu0 0.0
    %1186 = vmatpush1.msra.mxu0 0.0
    %1187 = vmatprep.mubr.f32.mxu0 0.0
    %1188 = vmatmul.mubr.f32.gmra.mrb[0].mxu0 %v1118
    %v1189 = vpop.f32.mrb[0].mxu0
    %v1190 = vadd.f32 0.0, %v1189
    %v1191 = vpop.f32.mrb[0].mxu0
    %1192 = vmatprep.mubr.f32.mxu0 0.0
    %1193 = vmatmul.mubr.f32.gmra.mrb[0].mxu0 %v1121
    %v1194 = vpop.f32.mrb[0].mxu0
    %v1195 = vadd.f32 0.0, %v1194
    %v1196 = vpop.f32.mrb[0].mxu0
    %1197 = vdwg.mxu0
    %1198 = vmatprep.subr.mxu0 %v973
    %1199 = vmatpush1.msra.mxu0 %v972
    %1200 = vmatprep.subr.mxu0 %v975
    %1201 = vmatpush1.msra.mxu0 %v974
    %1202 = vmatprep.subr.mxu0 %v977
    %1203 = vmatpush1.msra.mxu0 %v976
    %1204 = vmatprep.subr.mxu0 %v979
    %1205 = vmatpush1.msra.mxu0 %v978
    %1206 = vmatprep.subr.mxu0 %v981
    %1207 = vmatpush1.msra.mxu0 %v980
    %1208 = vmatprep.subr.mxu0 %v983
    %1209 = vmatpush1.msra.mxu0 %v982
    %1210 = vmatprep.subr.mxu0 %v985
    %1211 = vmatpush1.msra.mxu0 %v984
    %1212 = vmatprep.subr.mxu0 %v987
    %1213 = vmatpush1.msra.mxu0 %v986
    %1214 = vmatprep.subr.mxu0 %v989
    %1215 = vmatpush1.msra.mxu0 %v988
    %1216 = vmatprep.subr.mxu0 %v991
    %1217 = vmatpush1.msra.mxu0 %v990
    %1218 = vmatprep.subr.mxu0 %v993
    %1219 = vmatpush1.msra.mxu0 %v992
    %1220 = vmatprep.subr.mxu0 %v995
    %1221 = vmatpush1.msra.mxu0 %v994
    %1222 = vmatprep.subr.mxu0 %v997
    %1223 = vmatpush1.msra.mxu0 %v996
    %1224 = vmatprep.subr.mxu0 %v999
    %1225 = vmatpush1.msra.mxu0 %v998
    %1226 = vmatprep.subr.mxu0 %v1001
    %1227 = vmatpush1.msra.mxu0 %v1000
    %1228 = vmatprep.subr.mxu0 %v1003
    %1229 = vmatpush1.msra.mxu0 %v1002
    %1230 = vmatprep.subr.mxu0 0.0
    %1231 = vmatpush1.msra.mxu0 0.0
    %1232 = vmatprep.subr.mxu0 0.0
    %1233 = vmatpush1.msra.mxu0 0.0
    %1234 = vmatprep.subr.mxu0 0.0
    %1235 = vmatpush1.msra.mxu0 0.0
    %1236 = vmatprep.subr.mxu0 0.0
    %1237 = vmatpush1.msra.mxu0 0.0
    %1238 = vmatprep.subr.mxu0 0.0
    %1239 = vmatpush1.msra.mxu0 0.0
    %1240 = vmatprep.subr.mxu0 0.0
    %1241 = vmatpush1.msra.mxu0 0.0
    %1242 = vmatprep.subr.mxu0 0.0
    %1243 = vmatpush1.msra.mxu0 0.0
    %1244 = vmatprep.subr.mxu0 0.0
    %1245 = vmatpush1.msra.mxu0 0.0
    %1246 = vmatprep.subr.mxu0 0.0
    %1247 = vmatpush1.msra.mxu0 0.0
    %1248 = vmatprep.subr.mxu0 0.0
    %1249 = vmatpush1.msra.mxu0 0.0
    %1250 = vmatprep.subr.mxu0 0.0
    %1251 = vmatpush1.msra.mxu0 0.0
    %1252 = vmatprep.subr.mxu0 0.0
    %1253 = vmatpush1.msra.mxu0 0.0
    %1254 = vmatprep.subr.mxu0 0.0
    %1255 = vmatpush1.msra.mxu0 0.0
    %1256 = vmatprep.subr.mxu0 0.0
    %1257 = vmatpush1.msra.mxu0 0.0
    %1258 = vmatprep.subr.mxu0 0.0
    %1259 = vmatpush1.msra.mxu0 0.0
    %1260 = vmatprep.subr.mxu0 0.0
    %1261 = vmatpush1.msra.mxu0 0.0
    %1262 = vmatprep.mubr.f32.mxu0 0.0
    %1263 = vmatmul.mubr.f32.gmra.mrb[0].mxu0 %v1190
    %v1264 = vpop.f32.mrb[0].mxu0
    %v1265 = vadd.f32 0.0, %v1264
    %v1266 = vpop.f32.mrb[0].mxu0
    %v1267 = vadd.f32 0.0, %v1266
    %1268 = vmatprep.mubr.f32.mxu0 0.0
    %1269 = vmatmul.mubr.f32.gmra.mrb[0].mxu0 %v1195
    %v1270 = vpop.f32.mrb[0].mxu0
    %v1271 = vadd.f32 0.0, %v1270
    %v1272 = vpop.f32.mrb[0].mxu0
    %v1273 = vadd.f32 0.0, %v1272
    %1274 = vdwg.mxu0
    %1275 = vmatprep.subr.mxu0 %v861
    %1276 = vmatpush1.msra.mxu0 %v860
    %1277 = vmatprep.subr.mxu0 %v863
    %1278 = vmatpush1.msra.mxu0 %v862
    %1279 = vmatprep.subr.mxu0 %v865
    %1280 = vmatpush1.msra.mxu0 %v864
    %1281 = vmatprep.subr.mxu0 %v867
    %1282 = vmatpush1.msra.mxu0 %v866
    %1283 = vmatprep.subr.mxu0 %v869
    %1284 = vmatpush1.msra.mxu0 %v868
    %1285 = vmatprep.subr.mxu0 %v871
    %1286 = vmatpush1.msra.mxu0 %v870
    %1287 = vmatprep.subr.mxu0 %v873
    %1288 = vmatpush1.msra.mxu0 %v872
    %1289 = vmatprep.subr.mxu0 %v875
    %1290 = vmatpush1.msra.mxu0 %v874
    %1291 = vmatprep.subr.mxu0 %v877
    %1292 = vmatpush1.msra.mxu0 %v876
    %1293 = vmatprep.subr.mxu0 %v879
    %1294 = vmatpush1.msra.mxu0 %v878
    %1295 = vmatprep.subr.mxu0 %v881
    %1296 = vmatpush1.msra.mxu0 %v880
    %1297 = vmatprep.subr.mxu0 %v883
    %1298 = vmatpush1.msra.mxu0 %v882
    %1299 = vmatprep.subr.mxu0 %v885
    %1300 = vmatpush1.msra.mxu0 %v884
    %1301 = vmatprep.subr.mxu0 %v887
    %1302 = vmatpush1.msra.mxu0 %v886
    %1303 = vmatprep.subr.mxu0 %v889
    %1304 = vmatpush1.msra.mxu0 %v888
    %1305 = vmatprep.subr.mxu0 %v891
    %1306 = vmatpush1.msra.mxu0 %v890
    %1307 = vmatprep.subr.mxu0 0.0
    %1308 = vmatpush1.msra.mxu0 0.0
    %1309 = vmatprep.subr.mxu0 0.0
    %1310 = vmatpush1.msra.mxu0 0.0
    %1311 = vmatprep.subr.mxu0 0.0
    %1312 = vmatpush1.msra.mxu0 0.0
    %1313 = vmatprep.subr.mxu0 0.0
    %1314 = vmatpush1.msra.mxu0 0.0
    %1315 = vmatprep.subr.mxu0 0.0
    %1316 = vmatpush1.msra.mxu0 0.0
    %1317 = vmatprep.subr.mxu0 0.0
    %1318 = vmatpush1.msra.mxu0 0.0
    %1319 = vmatprep.subr.mxu0 0.0
    %1320 = vmatpush1.msra.mxu0 0.0
    %1321 = vmatprep.subr.mxu0 0.0
    %1322 = vmatpush1.msra.mxu0 0.0
    %1323 = vmatprep.subr.mxu0 0.0
    %1324 = vmatpush1.msra.mxu0 0.0
    %1325 = vmatprep.subr.mxu0 0.0
    %1326 = vmatpush1.msra.mxu0 0.0
    %1327 = vmatprep.subr.mxu0 0.0
    %1328 = vmatpush1.msra.mxu0 0.0
    %1329 = vmatprep.subr.mxu0 0.0
    %1330 = vmatpush1.msra.mxu0 0.0
    %1331 = vmatprep.subr.mxu0 0.0
    %1332 = vmatpush1.msra.mxu0 0.0
    %1333 = vmatprep.subr.mxu0 0.0
    %1334 = vmatpush1.msra.mxu0 0.0
    %1335 = vmatprep.subr.mxu0 0.0
    %1336 = vmatpush1.msra.mxu0 0.0
    %1337 = vmatprep.subr.mxu0 0.0
    %1338 = vmatpush1.msra.mxu0 0.0
    %1339 = vmatprep.mubr.f32.mxu0 0.0
    %1340 = vmatmul.mubr.f32.gmra.mrb[0].mxu0 %v1109
    %v1341 = vpop.f32.mrb[0].mxu0
    %v1342 = vadd.f32 %v1265, %v1341
    %v1343 = vpop.f32.mrb[0].mxu0
    %v1344 = vadd.f32 %v1267, %v1343
    %1345 = vmatprep.mubr.f32.mxu0 0.0
    %1346 = vmatmul.mubr.f32.gmra.mrb[0].mxu0 %v1114
    %v1347 = vpop.f32.mrb[0].mxu0
    %v1348 = vadd.f32 %v1271, %v1347
    %v1349 = vpop.f32.mrb[0].mxu0
    %v1350 = vadd.f32 %v1273, %v1349
    %1351 = vdwg.mxu0
    %1353 = vset.pattern.permute.xlu0 0
    %1354 = vperm.xlu0 %1353, %v1008
    %v1355 = vpop.permute.xlu0 %1354
    %1358 = vset.pattern.permute.xlu0 0
    %1359 = vperm.xlu0 %1358, %v1009
    %v1360 = vpop.permute.xlu0 %1359
    %v1362 = vadd.f32 %v1342, %v1355
    %v1363 = vadd.f32 %v1344, %v1355
    %v1364 = vadd.f32 %v1348, %v1360
    %v1365 = vadd.f32 %v1350, %v1360
    %1366 = vst [vmem:[#allocation2] sm:$0xff] %v1362
    %1367 = vst [vmem:[#allocation2 + $0x8] sm:$0xff] %v1363
    %1368 = vst [vmem:[#allocation2 + $0x10] sm:$0xff] %v1364
    %1369 = vst [vmem:[#allocation2 + $0x18] sm:$0xff] %v1365
    %v1370 = vmul.f32 %v715, %v1013
    %v1371 = vmul.f32 %v716, %v1018
    %v1372 = vadd.f32 %v1370, %v1025
    %v1373 = vadd.f32 %v1371, %v1030
    %v1374 = vmax.f32 %v1372, 0.0
    %v1375 = vmax.f32 %v1373, 0.0
    %1376 = vmatprep.subr.mxu0 0.0
    %1377 = vmatpush1.msra.mxu0 %v1374
    %1378 = vmatprep.subr.mxu0 0.0
    %1379 = vmatpush1.msra.mxu0 %v1375
    %1380 = vmatprep.subr.mxu0 0.0
    %1381 = vmatpush1.msra.mxu0 0.0
    %1382 = vmatprep.subr.mxu0 0.0
    %1383 = vmatpush1.msra.mxu0 0.0
    %1384 = vmatprep.subr.mxu0 0.0
    %1385 = vmatpush1.msra.mxu0 0.0
    %1386 = vmatprep.subr.mxu0 0.0
    %1387 = vmatpush1.msra.mxu0 0.0
    %1388 = vmatprep.subr.mxu0 0.0
    %1389 = vmatpush1.msra.mxu0 0.0
    %1390 = vmatprep.subr.mxu0 0.0
    %1391 = vmatpush1.msra.mxu0 0.0
    %1392 = vmatprep.subr.mxu0 0.0
    %1393 = vmatpush1.msra.mxu0 0.0
    %1394 = vmatprep.subr.mxu0 0.0
    %1395 = vmatpush1.msra.mxu0 0.0
    %1396 = vmatprep.subr.mxu0 0.0
    %1397 = vmatpush1.msra.mxu0 0.0
    %1398 = vmatprep.subr.mxu0 0.0
    %1399 = vmatpush1.msra.mxu0 0.0
    %1400 = vmatprep.subr.mxu0 0.0
    %1401 = vmatpush1.msra.mxu0 0.0
    %1402 = vmatprep.subr.mxu0 0.0
    %1403 = vmatpush1.msra.mxu0 0.0
    %1404 = vmatprep.subr.mxu0 0.0
    %1405 = vmatpush1.msra.mxu0 0.0
    %1406 = vmatprep.subr.mxu0 0.0
    %1407 = vmatpush1.msra.mxu0 0.0
    %1408 = vmatprep.subr.mxu0 0.0
    %1409 = vmatpush1.msra.mxu0 0.0
    %1410 = vmatprep.subr.mxu0 0.0
    %1411 = vmatpush1.msra.mxu0 0.0
    %1412 = vmatprep.subr.mxu0 0.0
    %1413 = vmatpush1.msra.mxu0 0.0
    %1414 = vmatprep.subr.mxu0 0.0
    %1415 = vmatpush1.msra.mxu0 0.0
    %1416 = vmatprep.subr.mxu0 0.0
    %1417 = vmatpush1.msra.mxu0 0.0
    %1418 = vmatprep.subr.mxu0 0.0
    %1419 = vmatpush1.msra.mxu0 0.0
    %1420 = vmatprep.subr.mxu0 0.0
    %1421 = vmatpush1.msra.mxu0 0.0
    %1422 = vmatprep.subr.mxu0 0.0
    %1423 = vmatpush1.msra.mxu0 0.0
    %1424 = vmatprep.subr.mxu0 0.0
    %1425 = vmatpush1.msra.mxu0 0.0
    %1426 = vmatprep.subr.mxu0 0.0
    %1427 = vmatpush1.msra.mxu0 0.0
    %1428 = vmatprep.subr.mxu0 0.0
    %1429 = vmatpush1.msra.mxu0 0.0
    %1430 = vmatprep.subr.mxu0 0.0
    %1431 = vmatpush1.msra.mxu0 0.0
    %1432 = vmatprep.subr.mxu0 0.0
    %1433 = vmatpush1.msra.mxu0 0.0
    %1434 = vmatprep.subr.mxu0 0.0
    %1435 = vmatpush1.msra.mxu0 0.0
    %1436 = vmatprep.subr.mxu0 0.0
    %1437 = vmatpush1.msra.mxu0 0.0
    %1438 = vmatprep.subr.mxu0 0.0
    %1439 = vmatpush1.msra.mxu0 0.0
    %1440 = vmatprep.mubr.f32.mxu0 0.0
    %1441 = vmatmul.mubr.f32.gmra.mrb[0].mxu0 %v1037
    %v1442 = vpop.f32.mrb[0].mxu0
    %v1443 = vadd.f32 0.0, %v1442
    %v1444 = vpop.f32.mrb[0].mxu0
    %1445 = vmatprep.mubr.f32.mxu0 0.0
    %1446 = vmatmul.mubr.f32.gmra.mrb[0].mxu0 %v1040
    %v1447 = vpop.f32.mrb[0].mxu0
    %v1448 = vadd.f32 0.0, %v1447
    %v1449 = vpop.f32.mrb[0].mxu0
    %1450 = vdwg.mxu0
    %1451 = vmatprep.subr.mxu0 0.0
    %1452 = vmatpush1.msra.mxu0 %v1374
    %1453 = vmatprep.subr.mxu0 0.0
    %1454 = vmatpush1.msra.mxu0 %v1375
    %1455 = vmatprep.subr.mxu0 0.0
    %1456 = vmatpush1.msra.mxu0 0.0
    %1457 = vmatprep.subr.mxu0 0.0
    %1458 = vmatpush1.msra.mxu0 0.0
    %1459 = vmatprep.subr.mxu0 0.0
    %1460 = vmatpush1.msra.mxu0 0.0
    %1461 = vmatprep.subr.mxu0 0.0
    %1462 = vmatpush1.msra.mxu0 0.0
    %1463 = vmatprep.subr.mxu0 0.0
    %1464 = vmatpush1.msra.mxu0 0.0
    %1465 = vmatprep.subr.mxu0 0.0
    %1466 = vmatpush1.msra.mxu0 0.0
    %1467 = vmatprep.subr.mxu0 0.0
    %1468 = vmatpush1.msra.mxu0 0.0
    %1469 = vmatprep.subr.mxu0 0.0
    %1470 = vmatpush1.msra.mxu0 0.0
    %1471 = vmatprep.subr.mxu0 0.0
    %1472 = vmatpush1.msra.mxu0 0.0
    %1473 = vmatprep.subr.mxu0 0.0
    %1474 = vmatpush1.msra.mxu0 0.0
    %1475 = vmatprep.subr.mxu0 0.0
    %1476 = vmatpush1.msra.mxu0 0.0
    %1477 = vmatprep.subr.mxu0 0.0
    %1478 = vmatpush1.msra.mxu0 0.0
    %1479 = vmatprep.subr.mxu0 0.0
    %1480 = vmatpush1.msra.mxu0 0.0
    %1481 = vmatprep.subr.mxu0 0.0
    %1482 = vmatpush1.msra.mxu0 0.0
    %1483 = vmatprep.subr.mxu0 0.0
    %1484 = vmatpush1.msra.mxu0 0.0
    %1485 = vmatprep.subr.mxu0 0.0
    %1486 = vmatpush1.msra.mxu0 0.0
    %1487 = vmatprep.subr.mxu0 0.0
    %1488 = vmatpush1.msra.mxu0 0.0
    %1489 = vmatprep.subr.mxu0 0.0
    %1490 = vmatpush1.msra.mxu0 0.0
    %1491 = vmatprep.subr.mxu0 0.0
    %1492 = vmatpush1.msra.mxu0 0.0
    %1493 = vmatprep.subr.mxu0 0.0
    %1494 = vmatpush1.msra.mxu0 0.0
    %1495 = vmatprep.subr.mxu0 0.0
    %1496 = vmatpush1.msra.mxu0 0.0
    %1497 = vmatprep.subr.mxu0 0.0
    %1498 = vmatpush1.msra.mxu0 0.0
    %1499 = vmatprep.subr.mxu0 0.0
    %1500 = vmatpush1.msra.mxu0 0.0
    %1501 = vmatprep.subr.mxu0 0.0
    %1502 = vmatpush1.msra.mxu0 0.0
    %1503 = vmatprep.subr.mxu0 0.0
    %1504 = vmatpush1.msra.mxu0 0.0
    %1505 = vmatprep.subr.mxu0 0.0
    %1506 = vmatpush1.msra.mxu0 0.0
    %1507 = vmatprep.subr.mxu0 0.0
    %1508 = vmatpush1.msra.mxu0 0.0
    %1509 = vmatprep.subr.mxu0 0.0
    %1510 = vmatpush1.msra.mxu0 0.0
    %1511 = vmatprep.subr.mxu0 0.0
    %1512 = vmatpush1.msra.mxu0 0.0
    %1513 = vmatprep.subr.mxu0 0.0
    %1514 = vmatpush1.msra.mxu0 0.0
    %1515 = vmatprep.mubr.f32.mxu0 0.0
    %1516 = vmatmul.mubr.f32.gmra.mrb[0].mxu0 %v1118
    %v1517 = vpop.f32.mrb[0].mxu0
    %v1518 = vadd.f32 0.0, %v1517
    %v1519 = vpop.f32.mrb[0].mxu0
    %1520 = vmatprep.mubr.f32.mxu0 0.0
    %1521 = vmatmul.mubr.f32.gmra.mrb[0].mxu0 %v1121
    %v1522 = vpop.f32.mrb[0].mxu0
    %v1523 = vadd.f32 0.0, %v1522
    %v1524 = vpop.f32.mrb[0].mxu0
    %1525 = vdwg.mxu0
    %1526 = vmatprep.subr.mxu0 %v973
    %1527 = vmatpush1.msra.mxu0 %v972
    %1528 = vmatprep.subr.mxu0 %v975
    %1529 = vmatpush1.msra.mxu0 %v974
    %1530 = vmatprep.subr.mxu0 %v977
    %1531 = vmatpush1.msra.mxu0 %v976
    %1532 = vmatprep.subr.mxu0 %v979
    %1533 = vmatpush1.msra.mxu0 %v978
    %1534 = vmatprep.subr.mxu0 %v981
    %1535 = vmatpush1.msra.mxu0 %v980
    %1536 = vmatprep.subr.mxu0 %v983
    %1537 = vmatpush1.msra.mxu0 %v982
    %1538 = vmatprep.subr.mxu0 %v985
    %1539 = vmatpush1.msra.mxu0 %v984
    %1540 = vmatprep.subr.mxu0 %v987
    %1541 = vmatpush1.msra.mxu0 %v986
    %1542 = vmatprep.subr.mxu0 %v989
    %1543 = vmatpush1.msra.mxu0 %v988
    %1544 = vmatprep.subr.mxu0 %v991
    %1545 = vmatpush1.msra.mxu0 %v990
    %1546 = vmatprep.subr.mxu0 %v993
    %1547 = vmatpush1.msra.mxu0 %v992
    %1548 = vmatprep.subr.mxu0 %v995
    %1549 = vmatpush1.msra.mxu0 %v994
    %1550 = vmatprep.subr.mxu0 %v997
    %1551 = vmatpush1.msra.mxu0 %v996
    %1552 = vmatprep.subr.mxu0 %v999
    %1553 = vmatpush1.msra.mxu0 %v998
    %1554 = vmatprep.subr.mxu0 %v1001
    %1555 = vmatpush1.msra.mxu0 %v1000
    %1556 = vmatprep.subr.mxu0 %v1003
    %1557 = vmatpush1.msra.mxu0 %v1002
    %1558 = vmatprep.subr.mxu0 0.0
    %1559 = vmatpush1.msra.mxu0 0.0
    %1560 = vmatprep.subr.mxu0 0.0
    %1561 = vmatpush1.msra.mxu0 0.0
    %1562 = vmatprep.subr.mxu0 0.0
    %1563 = vmatpush1.msra.mxu0 0.0
    %1564 = vmatprep.subr.mxu0 0.0
    %1565 = vmatpush1.msra.mxu0 0.0
    %1566 = vmatprep.subr.mxu0 0.0
    %1567 = vmatpush1.msra.mxu0 0.0
    %1568 = vmatprep.subr.mxu0 0.0
    %1569 = vmatpush1.msra.mxu0 0.0
    %1570 = vmatprep.subr.mxu0 0.0
    %1571 = vmatpush1.msra.mxu0 0.0
    %1572 = vmatprep.subr.mxu0 0.0
    %1573 = vmatpush1.msra.mxu0 0.0
    %1574 = vmatprep.subr.mxu0 0.0
    %1575 = vmatpush1.msra.mxu0 0.0
    %1576 = vmatprep.subr.mxu0 0.0
    %1577 = vmatpush1.msra.mxu0 0.0
    %1578 = vmatprep.subr.mxu0 0.0
    %1579 = vmatpush1.msra.mxu0 0.0
    %1580 = vmatprep.subr.mxu0 0.0
    %1581 = vmatpush1.msra.mxu0 0.0
    %1582 = vmatprep.subr.mxu0 0.0
    %1583 = vmatpush1.msra.mxu0 0.0
    %1584 = vmatprep.subr.mxu0 0.0
    %1585 = vmatpush1.msra.mxu0 0.0
    %1586 = vmatprep.subr.mxu0 0.0
    %1587 = vmatpush1.msra.mxu0 0.0
    %1588 = vmatprep.subr.mxu0 0.0
    %1589 = vmatpush1.msra.mxu0 0.0
    %1590 = vmatprep.mubr.f32.mxu0 0.0
    %1591 = vmatmul.mubr.f32.gmra.mrb[0].mxu0 %v1518
    %v1592 = vpop.f32.mrb[0].mxu0
    %v1593 = vadd.f32 0.0, %v1592
    %v1594 = vpop.f32.mrb[0].mxu0
    %v1595 = vadd.f32 0.0, %v1594
    %1596 = vmatprep.mubr.f32.mxu0 0.0
    %1597 = vmatmul.mubr.f32.gmra.mrb[0].mxu0 %v1523
    %v1598 = vpop.f32.mrb[0].mxu0
    %v1599 = vadd.f32 0.0, %v1598
    %v1600 = vpop.f32.mrb[0].mxu0
    %v1601 = vadd.f32 0.0, %v1600
    %1602 = vdwg.mxu0
    %1603 = vmatprep.subr.mxu0 %v861
    %1604 = vmatpush1.msra.mxu0 %v860
    %1605 = vmatprep.subr.mxu0 %v863
    %1606 = vmatpush1.msra.mxu0 %v862
    %1607 = vmatprep.subr.mxu0 %v865
    %1608 = vmatpush1.msra.mxu0 %v864
    %1609 = vmatprep.subr.mxu0 %v867
    %1610 = vmatpush1.msra.mxu0 %v866
    %1611 = vmatprep.subr.mxu0 %v869
    %1612 = vmatpush1.msra.mxu0 %v868
    %1613 = vmatprep.subr.mxu0 %v871
    %1614 = vmatpush1.msra.mxu0 %v870
    %1615 = vmatprep.subr.mxu0 %v873
    %1616 = vmatpush1.msra.mxu0 %v872
    %1617 = vmatprep.subr.mxu0 %v875
    %1618 = vmatpush1.msra.mxu0 %v874
    %1619 = vmatprep.subr.mxu0 %v877
    %1620 = vmatpush1.msra.mxu0 %v876
    %1621 = vmatprep.subr.mxu0 %v879
    %1622 = vmatpush1.msra.mxu0 %v878
    %1623 = vmatprep.subr.mxu0 %v881
    %1624 = vmatpush1.msra.mxu0 %v880
    %1625 = vmatprep.subr.mxu0 %v883
    %1626 = vmatpush1.msra.mxu0 %v882
    %1627 = vmatprep.subr.mxu0 %v885
    %1628 = vmatpush1.msra.mxu0 %v884
    %1629 = vmatprep.subr.mxu0 %v887
    %1630 = vmatpush1.msra.mxu0 %v886
    %1631 = vmatprep.subr.mxu0 %v889
    %1632 = vmatpush1.msra.mxu0 %v888
    %1633 = vmatprep.subr.mxu0 %v891
    %1634 = vmatpush1.msra.mxu0 %v890
    %1635 = vmatprep.subr.mxu0 0.0
    %1636 = vmatpush1.msra.mxu0 0.0
    %1637 = vmatprep.subr.mxu0 0.0
    %1638 = vmatpush1.msra.mxu0 0.0
    %1639 = vmatprep.subr.mxu0 0.0
    %1640 = vmatpush1.msra.mxu0 0.0
    %1641 = vmatprep.subr.mxu0 0.0
    %1642 = vmatpush1.msra.mxu0 0.0
    %1643 = vmatprep.subr.mxu0 0.0
    %1644 = vmatpush1.msra.mxu0 0.0
    %1645 = vmatprep.subr.mxu0 0.0
    %1646 = vmatpush1.msra.mxu0 0.0
    %1647 = vmatprep.subr.mxu0 0.0
    %1648 = vmatpush1.msra.mxu0 0.0
    %1649 = vmatprep.subr.mxu0 0.0
    %1650 = vmatpush1.msra.mxu0 0.0
    %1651 = vmatprep.subr.mxu0 0.0
    %1652 = vmatpush1.msra.mxu0 0.0
    %1653 = vmatprep.subr.mxu0 0.0
    %1654 = vmatpush1.msra.mxu0 0.0
    %1655 = vmatprep.subr.mxu0 0.0
    %1656 = vmatpush1.msra.mxu0 0.0
    %1657 = vmatprep.subr.mxu0 0.0
    %1658 = vmatpush1.msra.mxu0 0.0
    %1659 = vmatprep.subr.mxu0 0.0
    %1660 = vmatpush1.msra.mxu0 0.0
    %1661 = vmatprep.subr.mxu0 0.0
    %1662 = vmatpush1.msra.mxu0 0.0
    %1663 = vmatprep.subr.mxu0 0.0
    %1664 = vmatpush1.msra.mxu0 0.0
    %1665 = vmatprep.subr.mxu0 0.0
    %1666 = vmatpush1.msra.mxu0 0.0
    %1667 = vmatprep.mubr.f32.mxu0 0.0
    %1668 = vmatmul.mubr.f32.gmra.mrb[0].mxu0 %v1443
    %v1669 = vpop.f32.mrb[0].mxu0
    %v1670 = vadd.f32 %v1593, %v1669
    %v1671 = vpop.f32.mrb[0].mxu0
    %v1672 = vadd.f32 %v1595, %v1671
    %1673 = vmatprep.mubr.f32.mxu0 0.0
    %1674 = vmatmul.mubr.f32.gmra.mrb[0].mxu0 %v1448
    %v1675 = vpop.f32.mrb[0].mxu0
    %v1676 = vadd.f32 %v1599, %v1675
    %v1677 = vpop.f32.mrb[0].mxu0
    %v1678 = vadd.f32 %v1601, %v1677
    %1679 = vdwg.mxu0
    %v1680 = vadd.f32 %v1670, %v1355
    %v1681 = vadd.f32 %v1672, %v1355
    %v1682 = vadd.f32 %v1676, %v1360
    %v1683 = vadd.f32 %v1678, %v1360
    %s1684 = scalar_lea.vmem [#allocation2], 32
    %1685 = vst [vmem:[%s1684] sm:$0xff] %v1680
    %1686 = vst [vmem:[%s1684 + $0x8] sm:$0xff] %v1681
    %1687 = vst [vmem:[%s1684 + $0x10] sm:$0xff] %v1682
    %1688 = vst [vmem:[%s1684 + $0x18] sm:$0xff] %v1683
    // Predicated region
    $region50: #{decoder_block_forward.1} parent=1 // pred_check
      _
    $region51: #{decoder_block_forward.1} parent=1 // pred_check_branch
      %1690 = sbr.rel (0) target = $region53
    $region52: #{decoder_block_forward.1} parent=1 // pred_region
      %s1692 = ssub.s32 1024, 1024
      %1693 = vsyncadd [#allocation3], %s1692
      %s1694 = sshll.u32 [#allocation2], 4
      %s1695 = int_to_ptr.vmem [resolvable:$true] %s1694
      %1700 = dma.vmem_to_hbm [thread:$0]  %s1695, 1024, %s12, [#allocation3], 256, 256, 16
    $region53: #{decoder_block_forward.1} parent=1 // pred_fallthru
      _
    // Predicated region
    $region54: #{decoder_block_forward.1} parent=1 // pred_check
      _
    $region55: #{decoder_block_forward.1} parent=1 // pred_check_branch
      %1702 = sbr.rel (0) target = $region57
    $region56: #{decoder_block_forward.1} parent=1 // pred_region
      %1703 = dma.done [#allocation3], 1024
    $region57: #{decoder_block_forward.1} parent=1 // pred_fallthru
      _
    %1704 = vsyncpa [#allocation3], 1

</llo_original>
